<compile_context>
chip_gen: v7x
topology: tpu7x:2x2x1
jax: 0.10.0
libtpu: 0.0.40
codegen_flags: <defaults>
</compile_context>

<pallas_src>
import math

import jax
import jax.numpy as jnp
from jax import lax
from jax.experimental import pallas as pl
from jax.experimental.pallas import tpu as pltpu

INTEREST_RATE = 0.0     # Agent.__init__ default
COST_EPS = 1e-3         # proportional transaction-cost coefficient

_SUBLANE = 8
_LANE = 128
_UNROLL_T_MAX = 32      # fully unroll the time recurrence when T is small
_SLAB_BUDGET = 16 * 1024 * 1024   # VMEM budget for price slabs (fits all gens)


def _round_up(x, m):
    return (x + m - 1) // m * m


def _portfolio_kernel(prices_ref, wp_ref, wx_ref, wc_ref, b_ref, out_ref, pw_sc):
    tile_p, T, N = prices_ref.shape

    # ---- hoisted, non-recurrent policy term: pw[p,t,:] = prices[p,t,:] @ Wp + b
    # N is tiny, so this is N unrolled VPU broadcast-FMAs over the whole slab
    # instead of an MXU matmul with contraction depth N.
    prices = prices_ref[...]                                   # (tileP, T, N)
    pw = prices[:, :, 0:1] * wp_ref[0:1, :] + b_ref[...]       # (tileP, T, N)
    for i in range(1, N):
        pw = pw + prices[:, :, i:i + 1] * wp_ref[i:i + 1, :]

    # Weights loaded once, closed over by the recurrence body.
    wx_rows = [wx_ref[i:i + 1, :] for i in range(N)]           # each (1, N)
    wc_row = wc_ref[...]                                       # (1, N)

    def step(pos, cash, prices_t, pw_t):
        # policy: action = (prices@Wp + b) [hoisted] + pos@Wx + cash*wc
        px = pos[:, 0:1] * wx_rows[0]
        for i in range(1, N):
            px = px + pos[:, i:i + 1] * wx_rows[i]
        action = pw_t + px + cash * wc_row                     # (tileP, N)
        pos_new = pos + action
        # spent + transaction cost, fused: sum(a*p) + eps*sum(|a|*p)
        eff = action + COST_EPS * jnp.abs(action)
        spent_plus_cost = jnp.sum(eff * prices_t, axis=-1, keepdims=True)
        cash_new = cash * (1.0 + INTEREST_RATE) - spent_plus_cost
        return pos_new, cash_new

    pos = jnp.zeros((tile_p, N), jnp.float32)
    cash = jnp.zeros((tile_p, 1), jnp.float32)

    if T <= _UNROLL_T_MAX:
        # Fully unrolled recurrence: all time indices static (LLO gets full
        # visibility to overlap the independent per-step work).
        for t in range(T):
            pos, cash = step(pos, cash, prices[:, t, :], pw[:, t, :])
        prices_last = prices[:, T - 1, :]
    else:
        # Rolled recurrence for long horizons: stage the hoisted term in VMEM
        # and read both slabs per-step with a dynamic sublane slice.
        pw_sc[...] = pw

        def body(t, carry):
            p, c = carry
            prices_t = prices_ref[:, pl.ds(t, 1), :][:, 0, :]
            pw_t = pw_sc[:, pl.ds(t, 1), :][:, 0, :]
            return step(p, c, prices_t, pw_t)

        pos, cash = lax.fori_loop(0, T, body, (pos, cash),
                                  unroll=max(1, math.gcd(T, 8)))
        prices_last = prices_ref[:, T - 1, :]

    # return portfolio_value[:, -1] + cash_account[:, -1]
    pv = jnp.sum(pos * prices_last, axis=-1, keepdims=True)
    out_ref[...] = (pv + cash).astype(out_ref.dtype)


def compute_portfolio(hedge_paths, wp, wx, wc, b, *, tile_p=None):
    """hedge_paths: (P, T, N) (PyTorch layout, untouched). Returns (P,) float32."""
    P, T, N = hedge_paths.shape
    hp = hedge_paths.astype(jnp.float32)
    wp = wp.astype(jnp.float32)
    wx = wx.astype(jnp.float32)
    wc = wc.astype(jnp.float32)
    b = b.astype(jnp.float32)

    # Padded VMEM footprint of one path's (T, N) slab (last dims pad to (8,128)).
    slab_bytes = _round_up(T, _SUBLANE) * _round_up(N, _LANE) * 4
    if tile_p is None:
        # double-buffered prices block + pw scratch ~= 3 slabs per path in tile
        max_tile = max(_SUBLANE,
                       (_SLAB_BUDGET // (3 * slab_bytes)) // _SUBLANE * _SUBLANE)
        tile_p = min(_round_up(P, _SUBLANE), max_tile, 2048)
    tile_p = max(_SUBLANE, _round_up(min(tile_p, _round_up(P, _SUBLANE)), _SUBLANE))

    P_pad = _round_up(P, tile_p)
    if P_pad != P:
        hp = jnp.pad(hp, ((0, P_pad - P), (0, 0), (0, 0)))
    grid = (P_pad // tile_p,)

    out = pl.pallas_call(
        _portfolio_kernel,
        out_shape=jax.ShapeDtypeStruct((P_pad, 1), jnp.float32),
        grid_spec=pltpu.PrefetchScalarGridSpec(
            num_scalar_prefetch=0,
            grid=grid,
            in_specs=[
                pl.BlockSpec((tile_p, T, N), lambda p: (p, 0, 0)),  # price slab
                pl.BlockSpec((N, N), lambda p: (0, 0)),             # Wp
                pl.BlockSpec((N, N), lambda p: (0, 0)),             # Wx
                pl.BlockSpec((1, N), lambda p: (0, 0)),             # Wc
                pl.BlockSpec((1, N), lambda p: (0, 0)),             # b
            ],
            out_specs=pl.BlockSpec((tile_p, 1), lambda p: (p, 0)),
            scratch_shapes=[
                pltpu.VMEM((tile_p, T, N), jnp.float32),   # hoisted prices@Wp + b
            ],
        ),
        compiler_params=pltpu.CompilerParams(
            dimension_semantics=("parallel",),     # path tiles are independent
            vmem_limit_bytes=32 * 1024 * 1024,     # tile sizing keeps us below this
        ),
    )(hp, wp, wx, wc, b)
    return out[:P, 0]


def _reference(hedge_paths, wp, wx, wc, b):
    """Pure-JAX reference mirroring Agent.compute_portfolio semantics."""
    P, T, N = hedge_paths.shape
    positions = jnp.zeros((P, N), jnp.float32)
    cash = jnp.zeros((P, 1), jnp.float32)
    for t in range(T):
        prices = hedge_paths[:, t, :]
        action = prices @ wp + positions @ wx + cash @ wc + b
        positions = positions + action
        cost = COST_EPS * jnp.sum(jnp.abs(action) * prices, axis=-1, keepdims=True)
        spent = jnp.sum(action * prices, axis=-1, keepdims=True) + cost
        cash = cash * (1.0 + INTEREST_RATE) - spent
    pv = jnp.sum(positions * hedge_paths[:, -1, :], axis=-1)
    return pv + cash[:, 0]


if __name__ == "__main__":
    P, T, N = 16, 8, 4          # paths, timesteps, hedging instruments
    key = jax.random.PRNGKey(0)
    k1, k2, k3, k4, k5 = jax.random.split(key, 5)

    # Synthetic hedge price paths (strictly positive, ~1.0).
    hedge_paths = 1.0 + 0.05 * jax.random.normal(k1, (P, T, N), jnp.float32)

    # Deterministic policy-network parameters.
    wp = 0.1 * jax.random.normal(k2, (N, N), jnp.float32)
    wx = 0.1 * jax.random.normal(k3, (N, N), jnp.float32)
    wc = 0.1 * jax.random.normal(k4, (1, N), jnp.float32)
    b = 0.01 * jax.random.normal(k5, (1, N), jnp.float32)

    # Use tile_p=8 so the demo exercises a multi-tile (grid=(2,)) launch.
    pnl = compute_portfolio(hedge_paths, wp, wx, wc, b, tile_p=8)
    jax.block_until_ready(pnl)

    ref = _reference(hedge_paths, wp, wx, wc, b)
    assert pnl.shape == (P,)
    assert jnp.allclose(pnl, ref, rtol=1e-4, atol=1e-4), (pnl, ref)

    # TODO(synk): fit()/validate() training loops (optimizer, criterion) and
    # path simulation (generate_paths) are host-side orchestration, not kernels.
    print("KERNEL_OK")
</pallas_src>

<mosaic_0001>
module attributes {stable_mosaic.version = 11 : i64} {
  func.func @_portfolio_kernel(%arg0: i32, %arg1: memref<8x8x4xf32, #tpu.memory_space<vmem>>, %arg2: memref<4x4xf32, #tpu.memory_space<vmem>>, %arg3: memref<4x4xf32, #tpu.memory_space<vmem>>, %arg4: memref<1x4xf32, #tpu.memory_space<vmem>>, %arg5: memref<1x4xf32, #tpu.memory_space<vmem>>, %arg6: memref<8x1xf32, #tpu.memory_space<vmem>>, %arg7: memref<8x8x4xf32, #tpu.memory_space<vmem>>) attributes {dimension_semantics = [#tpu.dimension_semantics<parallel>], iteration_bounds = array<i64: 2>, scalar_prefetch = 0 : i64, scratch_operands = 1 : i64, tpu.core_type = #tpu.core_type<tc>, window_params = [{transform_indices = @transform_0, window_bounds = array<i64: 8, 8, 4>}, {pipeline_mode = #tpu.pipeline_mode<synchronous>, transform_indices = @transform_1, window_bounds = array<i64: 4, 4>}, {pipeline_mode = #tpu.pipeline_mode<synchronous>, transform_indices = @transform_2, window_bounds = array<i64: 4, 4>}, {pipeline_mode = #tpu.pipeline_mode<synchronous>, transform_indices = @transform_3, window_bounds = array<i64: 1, 4>}, {pipeline_mode = #tpu.pipeline_mode<synchronous>, transform_indices = @transform_4, window_bounds = array<i64: 1, 4>}, {transform_indices = @transform_5, window_bounds = array<i64: 8, 1>}]} {
    %c0 = arith.constant 0 : index
    %c0_0 = arith.constant 0 : index
    %c0_1 = arith.constant 0 : index
    %0 = vector.load %arg1[%c0, %c0_0, %c0_1] : memref<8x8x4xf32, #tpu.memory_space<vmem>>, vector<8x8x4xf32>
    %1 = vector.extract_strided_slice %0 {offsets = [0, 0, 0], sizes = [8, 8, 1], strides = [1, 1, 1]} : vector<8x8x4xf32> to vector<8x8x1xf32>
    %c0_2 = arith.constant 0 : index
    %c0_3 = arith.constant 0 : index
    %2 = vector.load %arg2[%c0_2, %c0_3] : memref<4x4xf32, #tpu.memory_space<vmem>>, vector<1x4xf32>
    %3 = vector.shape_cast %2 : vector<1x4xf32> to vector<1x1x4xf32>
    %4 = vector.broadcast %1 : vector<8x8x1xf32> to vector<8x8x4xf32>
    %5 = vector.broadcast %3 : vector<1x1x4xf32> to vector<8x8x4xf32>
    %6 = arith.mulf %4, %5 : vector<8x8x4xf32>
    %c0_4 = arith.constant 0 : index
    %c0_5 = arith.constant 0 : index
    %7 = vector.load %arg5[%c0_4, %c0_5] : memref<1x4xf32, #tpu.memory_space<vmem>>, vector<1x4xf32>
    %8 = vector.shape_cast %7 : vector<1x4xf32> to vector<1x1x4xf32>
    %9 = vector.broadcast %8 : vector<1x1x4xf32> to vector<8x8x4xf32>
    %10 = arith.addf %6, %9 : vector<8x8x4xf32>
    %11 = vector.extract_strided_slice %0 {offsets = [0, 0, 1], sizes = [8, 8, 1], strides = [1, 1, 1]} : vector<8x8x4xf32> to vector<8x8x1xf32>
    %c1 = arith.constant 1 : index
    %c0_6 = arith.constant 0 : index
    %12 = vector.load %arg2[%c1, %c0_6] : memref<4x4xf32, #tpu.memory_space<vmem>>, vector<1x4xf32>
    %13 = vector.shape_cast %12 : vector<1x4xf32> to vector<1x1x4xf32>
    %14 = vector.broadcast %11 : vector<8x8x1xf32> to vector<8x8x4xf32>
    %15 = vector.broadcast %13 : vector<1x1x4xf32> to vector<8x8x4xf32>
    %16 = arith.mulf %14, %15 : vector<8x8x4xf32>
    %17 = arith.addf %10, %16 : vector<8x8x4xf32>
    %18 = vector.extract_strided_slice %0 {offsets = [0, 0, 2], sizes = [8, 8, 1], strides = [1, 1, 1]} : vector<8x8x4xf32> to vector<8x8x1xf32>
    %c2 = arith.constant 2 : index
    %c0_7 = arith.constant 0 : index
    %19 = vector.load %arg2[%c2, %c0_7] : memref<4x4xf32, #tpu.memory_space<vmem>>, vector<1x4xf32>
    %20 = vector.shape_cast %19 : vector<1x4xf32> to vector<1x1x4xf32>
    %21 = vector.broadcast %18 : vector<8x8x1xf32> to vector<8x8x4xf32>
    %22 = vector.broadcast %20 : vector<1x1x4xf32> to vector<8x8x4xf32>
    %23 = arith.mulf %21, %22 : vector<8x8x4xf32>
    %24 = arith.addf %17, %23 : vector<8x8x4xf32>
    %25 = vector.extract_strided_slice %0 {offsets = [0, 0, 3], sizes = [8, 8, 1], strides = [1, 1, 1]} : vector<8x8x4xf32> to vector<8x8x1xf32>
    %c3 = arith.constant 3 : index
    %c0_8 = arith.constant 0 : index
    %26 = vector.load %arg2[%c3, %c0_8] : memref<4x4xf32, #tpu.memory_space<vmem>>, vector<1x4xf32>
    %27 = vector.shape_cast %26 : vector<1x4xf32> to vector<1x1x4xf32>
    %28 = vector.broadcast %25 : vector<8x8x1xf32> to vector<8x8x4xf32>
    %29 = vector.broadcast %27 : vector<1x1x4xf32> to vector<8x8x4xf32>
    %30 = arith.mulf %28, %29 : vector<8x8x4xf32>
    %31 = arith.addf %24, %30 : vector<8x8x4xf32>
    %c0_9 = arith.constant 0 : index
    %c0_10 = arith.constant 0 : index
    %32 = vector.load %arg3[%c0_9, %c0_10] : memref<4x4xf32, #tpu.memory_space<vmem>>, vector<1x4xf32>
    %c1_11 = arith.constant 1 : index
    %c0_12 = arith.constant 0 : index
    %33 = vector.load %arg3[%c1_11, %c0_12] : memref<4x4xf32, #tpu.memory_space<vmem>>, vector<1x4xf32>
    %c2_13 = arith.constant 2 : index
    %c0_14 = arith.constant 0 : index
    %34 = vector.load %arg3[%c2_13, %c0_14] : memref<4x4xf32, #tpu.memory_space<vmem>>, vector<1x4xf32>
    %c3_15 = arith.constant 3 : index
    %c0_16 = arith.constant 0 : index
    %35 = vector.load %arg3[%c3_15, %c0_16] : memref<4x4xf32, #tpu.memory_space<vmem>>, vector<1x4xf32>
    %c0_17 = arith.constant 0 : index
    %c0_18 = arith.constant 0 : index
    %36 = vector.load %arg4[%c0_17, %c0_18] : memref<1x4xf32, #tpu.memory_space<vmem>>, vector<1x4xf32>
    %cst = arith.constant 0.000000e+00 : f32
    %37 = vector.broadcast %cst : f32 to vector<8x4xf32>
    %cst_19 = arith.constant 0.000000e+00 : f32
    %38 = vector.broadcast %cst_19 : f32 to vector<8x1xf32>
    %39 = vector.extract_strided_slice %0 {offsets = [0, 0, 0], sizes = [8, 1, 4], strides = [1, 1, 1]} : vector<8x8x4xf32> to vector<8x1x4xf32>
    %40 = vector.shape_cast %39 : vector<8x1x4xf32> to vector<8x4xf32>
    %41 = vector.extract_strided_slice %31 {offsets = [0, 0, 0], sizes = [8, 1, 4], strides = [1, 1, 1]} : vector<8x8x4xf32> to vector<8x1x4xf32>
    %42 = vector.shape_cast %41 : vector<8x1x4xf32> to vector<8x4xf32>
    %43 = vector.extract_strided_slice %37 {offsets = [0, 0], sizes = [8, 1], strides = [1, 1]} : vector<8x4xf32> to vector<8x1xf32>
    %44 = vector.broadcast %43 : vector<8x1xf32> to vector<8x4xf32>
    %45 = vector.broadcast %32 : vector<1x4xf32> to vector<8x4xf32>
    %46 = arith.mulf %44, %45 : vector<8x4xf32>
    %47 = vector.extract_strided_slice %37 {offsets = [0, 1], sizes = [8, 1], strides = [1, 1]} : vector<8x4xf32> to vector<8x1xf32>
    %48 = vector.broadcast %47 : vector<8x1xf32> to vector<8x4xf32>
    %49 = vector.broadcast %33 : vector<1x4xf32> to vector<8x4xf32>
    %50 = arith.mulf %48, %49 : vector<8x4xf32>
    %51 = arith.addf %46, %50 : vector<8x4xf32>
    %52 = vector.extract_strided_slice %37 {offsets = [0, 2], sizes = [8, 1], strides = [1, 1]} : vector<8x4xf32> to vector<8x1xf32>
    %53 = vector.broadcast %52 : vector<8x1xf32> to vector<8x4xf32>
    %54 = vector.broadcast %34 : vector<1x4xf32> to vector<8x4xf32>
    %55 = arith.mulf %53, %54 : vector<8x4xf32>
    %56 = arith.addf %51, %55 : vector<8x4xf32>
    %57 = vector.extract_strided_slice %37 {offsets = [0, 3], sizes = [8, 1], strides = [1, 1]} : vector<8x4xf32> to vector<8x1xf32>
    %58 = vector.broadcast %57 : vector<8x1xf32> to vector<8x4xf32>
    %59 = vector.broadcast %35 : vector<1x4xf32> to vector<8x4xf32>
    %60 = arith.mulf %58, %59 : vector<8x4xf32>
    %61 = arith.addf %56, %60 : vector<8x4xf32>
    %62 = arith.addf %42, %61 : vector<8x4xf32>
    %63 = vector.broadcast %38 : vector<8x1xf32> to vector<8x4xf32>
    %64 = vector.broadcast %36 : vector<1x4xf32> to vector<8x4xf32>
    %65 = arith.mulf %63, %64 : vector<8x4xf32>
    %66 = arith.addf %62, %65 : vector<8x4xf32>
    %67 = arith.addf %37, %66 : vector<8x4xf32>
    %68 = math.absf %66 : vector<8x4xf32>
    %cst_20 = arith.constant 1.000000e-03 : f32
    %69 = vector.broadcast %cst_20 : f32 to vector<8x4xf32>
    %70 = arith.mulf %69, %68 : vector<8x4xf32>
    %71 = arith.addf %66, %70 : vector<8x4xf32>
    %72 = arith.mulf %71, %40 : vector<8x4xf32>
    %cst_21 = arith.constant dense<0.000000e+00> : vector<8xf32>
    %73 = vector.multi_reduction <add>, %72, %cst_21 [1] : vector<8x4xf32> to vector<8xf32>
    %74 = vector.shape_cast %73 : vector<8xf32> to vector<8x1xf32>
    %cst_22 = arith.constant 1.000000e+00 : f32
    %75 = vector.broadcast %cst_22 : f32 to vector<8x1xf32>
    %76 = arith.mulf %38, %75 : vector<8x1xf32>
    %77 = arith.subf %76, %74 : vector<8x1xf32>
    %78 = vector.extract_strided_slice %0 {offsets = [0, 1, 0], sizes = [8, 1, 4], strides = [1, 1, 1]} : vector<8x8x4xf32> to vector<8x1x4xf32>
    %79 = vector.shape_cast %78 : vector<8x1x4xf32> to vector<8x4xf32>
    %80 = vector.extract_strided_slice %31 {offsets = [0, 1, 0], sizes = [8, 1, 4], strides = [1, 1, 1]} : vector<8x8x4xf32> to vector<8x1x4xf32>
    %81 = vector.shape_cast %80 : vector<8x1x4xf32> to vector<8x4xf32>
    %82 = vector.extract_strided_slice %67 {offsets = [0, 0], sizes = [8, 1], strides = [1, 1]} : vector<8x4xf32> to vector<8x1xf32>
    %83 = vector.broadcast %82 : vector<8x1xf32> to vector<8x4xf32>
    %84 = vector.broadcast %32 : vector<1x4xf32> to vector<8x4xf32>
    %85 = arith.mulf %83, %84 : vector<8x4xf32>
    %86 = vector.extract_strided_slice %67 {offsets = [0, 1], sizes = [8, 1], strides = [1, 1]} : vector<8x4xf32> to vector<8x1xf32>
    %87 = vector.broadcast %86 : vector<8x1xf32> to vector<8x4xf32>
    %88 = vector.broadcast %33 : vector<1x4xf32> to vector<8x4xf32>
    %89 = arith.mulf %87, %88 : vector<8x4xf32>
    %90 = arith.addf %85, %89 : vector<8x4xf32>
    %91 = vector.extract_strided_slice %67 {offsets = [0, 2], sizes = [8, 1], strides = [1, 1]} : vector<8x4xf32> to vector<8x1xf32>
    %92 = vector.broadcast %91 : vector<8x1xf32> to vector<8x4xf32>
    %93 = vector.broadcast %34 : vector<1x4xf32> to vector<8x4xf32>
    %94 = arith.mulf %92, %93 : vector<8x4xf32>
    %95 = arith.addf %90, %94 : vector<8x4xf32>
    %96 = vector.extract_strided_slice %67 {offsets = [0, 3], sizes = [8, 1], strides = [1, 1]} : vector<8x4xf32> to vector<8x1xf32>
    %97 = vector.broadcast %96 : vector<8x1xf32> to vector<8x4xf32>
    %98 = vector.broadcast %35 : vector<1x4xf32> to vector<8x4xf32>
    %99 = arith.mulf %97, %98 : vector<8x4xf32>
    %100 = arith.addf %95, %99 : vector<8x4xf32>
    %101 = arith.addf %81, %100 : vector<8x4xf32>
    %102 = vector.broadcast %77 : vector<8x1xf32> to vector<8x4xf32>
    %103 = vector.broadcast %36 : vector<1x4xf32> to vector<8x4xf32>
    %104 = arith.mulf %102, %103 : vector<8x4xf32>
    %105 = arith.addf %101, %104 : vector<8x4xf32>
    %106 = arith.addf %67, %105 : vector<8x4xf32>
    %107 = math.absf %105 : vector<8x4xf32>
    %cst_23 = arith.constant 1.000000e-03 : f32
    %108 = vector.broadcast %cst_23 : f32 to vector<8x4xf32>
    %109 = arith.mulf %108, %107 : vector<8x4xf32>
    %110 = arith.addf %105, %109 : vector<8x4xf32>
    %111 = arith.mulf %110, %79 : vector<8x4xf32>
    %cst_24 = arith.constant dense<0.000000e+00> : vector<8xf32>
    %112 = vector.multi_reduction <add>, %111, %cst_24 [1] : vector<8x4xf32> to vector<8xf32>
    %113 = vector.shape_cast %112 : vector<8xf32> to vector<8x1xf32>
    %cst_25 = arith.constant 1.000000e+00 : f32
    %114 = vector.broadcast %cst_25 : f32 to vector<8x1xf32>
    %115 = arith.mulf %77, %114 : vector<8x1xf32>
    %116 = arith.subf %115, %113 : vector<8x1xf32>
    %117 = vector.extract_strided_slice %0 {offsets = [0, 2, 0], sizes = [8, 1, 4], strides = [1, 1, 1]} : vector<8x8x4xf32> to vector<8x1x4xf32>
    %118 = vector.shape_cast %117 : vector<8x1x4xf32> to vector<8x4xf32>
    %119 = vector.extract_strided_slice %31 {offsets = [0, 2, 0], sizes = [8, 1, 4], strides = [1, 1, 1]} : vector<8x8x4xf32> to vector<8x1x4xf32>
    %120 = vector.shape_cast %119 : vector<8x1x4xf32> to vector<8x4xf32>
    %121 = vector.extract_strided_slice %106 {offsets = [0, 0], sizes = [8, 1], strides = [1, 1]} : vector<8x4xf32> to vector<8x1xf32>
    %122 = vector.broadcast %121 : vector<8x1xf32> to vector<8x4xf32>
    %123 = vector.broadcast %32 : vector<1x4xf32> to vector<8x4xf32>
    %124 = arith.mulf %122, %123 : vector<8x4xf32>
    %125 = vector.extract_strided_slice %106 {offsets = [0, 1], sizes = [8, 1], strides = [1, 1]} : vector<8x4xf32> to vector<8x1xf32>
    %126 = vector.broadcast %125 : vector<8x1xf32> to vector<8x4xf32>
    %127 = vector.broadcast %33 : vector<1x4xf32> to vector<8x4xf32>
    %128 = arith.mulf %126, %127 : vector<8x4xf32>
    %129 = arith.addf %124, %128 : vector<8x4xf32>
    %130 = vector.extract_strided_slice %106 {offsets = [0, 2], sizes = [8, 1], strides = [1, 1]} : vector<8x4xf32> to vector<8x1xf32>
    %131 = vector.broadcast %130 : vector<8x1xf32> to vector<8x4xf32>
    %132 = vector.broadcast %34 : vector<1x4xf32> to vector<8x4xf32>
    %133 = arith.mulf %131, %132 : vector<8x4xf32>
    %134 = arith.addf %129, %133 : vector<8x4xf32>
    %135 = vector.extract_strided_slice %106 {offsets = [0, 3], sizes = [8, 1], strides = [1, 1]} : vector<8x4xf32> to vector<8x1xf32>
    %136 = vector.broadcast %135 : vector<8x1xf32> to vector<8x4xf32>
    %137 = vector.broadcast %35 : vector<1x4xf32> to vector<8x4xf32>
    %138 = arith.mulf %136, %137 : vector<8x4xf32>
    %139 = arith.addf %134, %138 : vector<8x4xf32>
    %140 = arith.addf %120, %139 : vector<8x4xf32>
    %141 = vector.broadcast %116 : vector<8x1xf32> to vector<8x4xf32>
    %142 = vector.broadcast %36 : vector<1x4xf32> to vector<8x4xf32>
    %143 = arith.mulf %141, %142 : vector<8x4xf32>
    %144 = arith.addf %140, %143 : vector<8x4xf32>
    %145 = arith.addf %106, %144 : vector<8x4xf32>
    %146 = math.absf %144 : vector<8x4xf32>
    %cst_26 = arith.constant 1.000000e-03 : f32
    %147 = vector.broadcast %cst_26 : f32 to vector<8x4xf32>
    %148 = arith.mulf %147, %146 : vector<8x4xf32>
    %149 = arith.addf %144, %148 : vector<8x4xf32>
    %150 = arith.mulf %149, %118 : vector<8x4xf32>
    %cst_27 = arith.constant dense<0.000000e+00> : vector<8xf32>
    %151 = vector.multi_reduction <add>, %150, %cst_27 [1] : vector<8x4xf32> to vector<8xf32>
    %152 = vector.shape_cast %151 : vector<8xf32> to vector<8x1xf32>
    %cst_28 = arith.constant 1.000000e+00 : f32
    %153 = vector.broadcast %cst_28 : f32 to vector<8x1xf32>
    %154 = arith.mulf %116, %153 : vector<8x1xf32>
    %155 = arith.subf %154, %152 : vector<8x1xf32>
    %156 = vector.extract_strided_slice %0 {offsets = [0, 3, 0], sizes = [8, 1, 4], strides = [1, 1, 1]} : vector<8x8x4xf32> to vector<8x1x4xf32>
    %157 = vector.shape_cast %156 : vector<8x1x4xf32> to vector<8x4xf32>
    %158 = vector.extract_strided_slice %31 {offsets = [0, 3, 0], sizes = [8, 1, 4], strides = [1, 1, 1]} : vector<8x8x4xf32> to vector<8x1x4xf32>
    %159 = vector.shape_cast %158 : vector<8x1x4xf32> to vector<8x4xf32>
    %160 = vector.extract_strided_slice %145 {offsets = [0, 0], sizes = [8, 1], strides = [1, 1]} : vector<8x4xf32> to vector<8x1xf32>
    %161 = vector.broadcast %160 : vector<8x1xf32> to vector<8x4xf32>
    %162 = vector.broadcast %32 : vector<1x4xf32> to vector<8x4xf32>
    %163 = arith.mulf %161, %162 : vector<8x4xf32>
    %164 = vector.extract_strided_slice %145 {offsets = [0, 1], sizes = [8, 1], strides = [1, 1]} : vector<8x4xf32> to vector<8x1xf32>
    %165 = vector.broadcast %164 : vector<8x1xf32> to vector<8x4xf32>
    %166 = vector.broadcast %33 : vector<1x4xf32> to vector<8x4xf32>
    %167 = arith.mulf %165, %166 : vector<8x4xf32>
    %168 = arith.addf %163, %167 : vector<8x4xf32>
    %169 = vector.extract_strided_slice %145 {offsets = [0, 2], sizes = [8, 1], strides = [1, 1]} : vector<8x4xf32> to vector<8x1xf32>
    %170 = vector.broadcast %169 : vector<8x1xf32> to vector<8x4xf32>
    %171 = vector.broadcast %34 : vector<1x4xf32> to vector<8x4xf32>
    %172 = arith.mulf %170, %171 : vector<8x4xf32>
    %173 = arith.addf %168, %172 : vector<8x4xf32>
    %174 = vector.extract_strided_slice %145 {offsets = [0, 3], sizes = [8, 1], strides = [1, 1]} : vector<8x4xf32> to vector<8x1xf32>
    %175 = vector.broadcast %174 : vector<8x1xf32> to vector<8x4xf32>
    %176 = vector.broadcast %35 : vector<1x4xf32> to vector<8x4xf32>
    %177 = arith.mulf %175, %176 : vector<8x4xf32>
    %178 = arith.addf %173, %177 : vector<8x4xf32>
    %179 = arith.addf %159, %178 : vector<8x4xf32>
    %180 = vector.broadcast %155 : vector<8x1xf32> to vector<8x4xf32>
    %181 = vector.broadcast %36 : vector<1x4xf32> to vector<8x4xf32>
    %182 = arith.mulf %180, %181 : vector<8x4xf32>
    %183 = arith.addf %179, %182 : vector<8x4xf32>
    %184 = arith.addf %145, %183 : vector<8x4xf32>
    %185 = math.absf %183 : vector<8x4xf32>
    %cst_29 = arith.constant 1.000000e-03 : f32
    %186 = vector.broadcast %cst_29 : f32 to vector<8x4xf32>
    %187 = arith.mulf %186, %185 : vector<8x4xf32>
    %188 = arith.addf %183, %187 : vector<8x4xf32>
    %189 = arith.mulf %188, %157 : vector<8x4xf32>
    %cst_30 = arith.constant dense<0.000000e+00> : vector<8xf32>
    %190 = vector.multi_reduction <add>, %189, %cst_30 [1] : vector<8x4xf32> to vector<8xf32>
    %191 = vector.shape_cast %190 : vector<8xf32> to vector<8x1xf32>
    %cst_31 = arith.constant 1.000000e+00 : f32
    %192 = vector.broadcast %cst_31 : f32 to vector<8x1xf32>
    %193 = arith.mulf %155, %192 : vector<8x1xf32>
    %194 = arith.subf %193, %191 : vector<8x1xf32>
    %195 = vector.extract_strided_slice %0 {offsets = [0, 4, 0], sizes = [8, 1, 4], strides = [1, 1, 1]} : vector<8x8x4xf32> to vector<8x1x4xf32>
    %196 = vector.shape_cast %195 : vector<8x1x4xf32> to vector<8x4xf32>
    %197 = vector.extract_strided_slice %31 {offsets = [0, 4, 0], sizes = [8, 1, 4], strides = [1, 1, 1]} : vector<8x8x4xf32> to vector<8x1x4xf32>
    %198 = vector.shape_cast %197 : vector<8x1x4xf32> to vector<8x4xf32>
    %199 = vector.extract_strided_slice %184 {offsets = [0, 0], sizes = [8, 1], strides = [1, 1]} : vector<8x4xf32> to vector<8x1xf32>
    %200 = vector.broadcast %199 : vector<8x1xf32> to vector<8x4xf32>
    %201 = vector.broadcast %32 : vector<1x4xf32> to vector<8x4xf32>
    %202 = arith.mulf %200, %201 : vector<8x4xf32>
    %203 = vector.extract_strided_slice %184 {offsets = [0, 1], sizes = [8, 1], strides = [1, 1]} : vector<8x4xf32> to vector<8x1xf32>
    %204 = vector.broadcast %203 : vector<8x1xf32> to vector<8x4xf32>
    %205 = vector.broadcast %33 : vector<1x4xf32> to vector<8x4xf32>
    %206 = arith.mulf %204, %205 : vector<8x4xf32>
    %207 = arith.addf %202, %206 : vector<8x4xf32>
    %208 = vector.extract_strided_slice %184 {offsets = [0, 2], sizes = [8, 1], strides = [1, 1]} : vector<8x4xf32> to vector<8x1xf32>
    %209 = vector.broadcast %208 : vector<8x1xf32> to vector<8x4xf32>
    %210 = vector.broadcast %34 : vector<1x4xf32> to vector<8x4xf32>
    %211 = arith.mulf %209, %210 : vector<8x4xf32>
    %212 = arith.addf %207, %211 : vector<8x4xf32>
    %213 = vector.extract_strided_slice %184 {offsets = [0, 3], sizes = [8, 1], strides = [1, 1]} : vector<8x4xf32> to vector<8x1xf32>
    %214 = vector.broadcast %213 : vector<8x1xf32> to vector<8x4xf32>
    %215 = vector.broadcast %35 : vector<1x4xf32> to vector<8x4xf32>
    %216 = arith.mulf %214, %215 : vector<8x4xf32>
    %217 = arith.addf %212, %216 : vector<8x4xf32>
    %218 = arith.addf %198, %217 : vector<8x4xf32>
    %219 = vector.broadcast %194 : vector<8x1xf32> to vector<8x4xf32>
    %220 = vector.broadcast %36 : vector<1x4xf32> to vector<8x4xf32>
    %221 = arith.mulf %219, %220 : vector<8x4xf32>
    %222 = arith.addf %218, %221 : vector<8x4xf32>
    %223 = arith.addf %184, %222 : vector<8x4xf32>
    %224 = math.absf %222 : vector<8x4xf32>
    %cst_32 = arith.constant 1.000000e-03 : f32
    %225 = vector.broadcast %cst_32 : f32 to vector<8x4xf32>
    %226 = arith.mulf %225, %224 : vector<8x4xf32>
    %227 = arith.addf %222, %226 : vector<8x4xf32>
    %228 = arith.mulf %227, %196 : vector<8x4xf32>
    %cst_33 = arith.constant dense<0.000000e+00> : vector<8xf32>
    %229 = vector.multi_reduction <add>, %228, %cst_33 [1] : vector<8x4xf32> to vector<8xf32>
    %230 = vector.shape_cast %229 : vector<8xf32> to vector<8x1xf32>
    %cst_34 = arith.constant 1.000000e+00 : f32
    %231 = vector.broadcast %cst_34 : f32 to vector<8x1xf32>
    %232 = arith.mulf %194, %231 : vector<8x1xf32>
    %233 = arith.subf %232, %230 : vector<8x1xf32>
    %234 = vector.extract_strided_slice %0 {offsets = [0, 5, 0], sizes = [8, 1, 4], strides = [1, 1, 1]} : vector<8x8x4xf32> to vector<8x1x4xf32>
    %235 = vector.shape_cast %234 : vector<8x1x4xf32> to vector<8x4xf32>
    %236 = vector.extract_strided_slice %31 {offsets = [0, 5, 0], sizes = [8, 1, 4], strides = [1, 1, 1]} : vector<8x8x4xf32> to vector<8x1x4xf32>
    %237 = vector.shape_cast %236 : vector<8x1x4xf32> to vector<8x4xf32>
    %238 = vector.extract_strided_slice %223 {offsets = [0, 0], sizes = [8, 1], strides = [1, 1]} : vector<8x4xf32> to vector<8x1xf32>
    %239 = vector.broadcast %238 : vector<8x1xf32> to vector<8x4xf32>
    %240 = vector.broadcast %32 : vector<1x4xf32> to vector<8x4xf32>
    %241 = arith.mulf %239, %240 : vector<8x4xf32>
    %242 = vector.extract_strided_slice %223 {offsets = [0, 1], sizes = [8, 1], strides = [1, 1]} : vector<8x4xf32> to vector<8x1xf32>
    %243 = vector.broadcast %242 : vector<8x1xf32> to vector<8x4xf32>
    %244 = vector.broadcast %33 : vector<1x4xf32> to vector<8x4xf32>
    %245 = arith.mulf %243, %244 : vector<8x4xf32>
    %246 = arith.addf %241, %245 : vector<8x4xf32>
    %247 = vector.extract_strided_slice %223 {offsets = [0, 2], sizes = [8, 1], strides = [1, 1]} : vector<8x4xf32> to vector<8x1xf32>
    %248 = vector.broadcast %247 : vector<8x1xf32> to vector<8x4xf32>
    %249 = vector.broadcast %34 : vector<1x4xf32> to vector<8x4xf32>
    %250 = arith.mulf %248, %249 : vector<8x4xf32>
    %251 = arith.addf %246, %250 : vector<8x4xf32>
    %252 = vector.extract_strided_slice %223 {offsets = [0, 3], sizes = [8, 1], strides = [1, 1]} : vector<8x4xf32> to vector<8x1xf32>
    %253 = vector.broadcast %252 : vector<8x1xf32> to vector<8x4xf32>
    %254 = vector.broadcast %35 : vector<1x4xf32> to vector<8x4xf32>
    %255 = arith.mulf %253, %254 : vector<8x4xf32>
    %256 = arith.addf %251, %255 : vector<8x4xf32>
    %257 = arith.addf %237, %256 : vector<8x4xf32>
    %258 = vector.broadcast %233 : vector<8x1xf32> to vector<8x4xf32>
    %259 = vector.broadcast %36 : vector<1x4xf32> to vector<8x4xf32>
    %260 = arith.mulf %258, %259 : vector<8x4xf32>
    %261 = arith.addf %257, %260 : vector<8x4xf32>
    %262 = arith.addf %223, %261 : vector<8x4xf32>
    %263 = math.absf %261 : vector<8x4xf32>
    %cst_35 = arith.constant 1.000000e-03 : f32
    %264 = vector.broadcast %cst_35 : f32 to vector<8x4xf32>
    %265 = arith.mulf %264, %263 : vector<8x4xf32>
    %266 = arith.addf %261, %265 : vector<8x4xf32>
    %267 = arith.mulf %266, %235 : vector<8x4xf32>
    %cst_36 = arith.constant dense<0.000000e+00> : vector<8xf32>
    %268 = vector.multi_reduction <add>, %267, %cst_36 [1] : vector<8x4xf32> to vector<8xf32>
    %269 = vector.shape_cast %268 : vector<8xf32> to vector<8x1xf32>
    %cst_37 = arith.constant 1.000000e+00 : f32
    %270 = vector.broadcast %cst_37 : f32 to vector<8x1xf32>
    %271 = arith.mulf %233, %270 : vector<8x1xf32>
    %272 = arith.subf %271, %269 : vector<8x1xf32>
    %273 = vector.extract_strided_slice %0 {offsets = [0, 6, 0], sizes = [8, 1, 4], strides = [1, 1, 1]} : vector<8x8x4xf32> to vector<8x1x4xf32>
    %274 = vector.shape_cast %273 : vector<8x1x4xf32> to vector<8x4xf32>
    %275 = vector.extract_strided_slice %31 {offsets = [0, 6, 0], sizes = [8, 1, 4], strides = [1, 1, 1]} : vector<8x8x4xf32> to vector<8x1x4xf32>
    %276 = vector.shape_cast %275 : vector<8x1x4xf32> to vector<8x4xf32>
    %277 = vector.extract_strided_slice %262 {offsets = [0, 0], sizes = [8, 1], strides = [1, 1]} : vector<8x4xf32> to vector<8x1xf32>
    %278 = vector.broadcast %277 : vector<8x1xf32> to vector<8x4xf32>
    %279 = vector.broadcast %32 : vector<1x4xf32> to vector<8x4xf32>
    %280 = arith.mulf %278, %279 : vector<8x4xf32>
    %281 = vector.extract_strided_slice %262 {offsets = [0, 1], sizes = [8, 1], strides = [1, 1]} : vector<8x4xf32> to vector<8x1xf32>
    %282 = vector.broadcast %281 : vector<8x1xf32> to vector<8x4xf32>
    %283 = vector.broadcast %33 : vector<1x4xf32> to vector<8x4xf32>
    %284 = arith.mulf %282, %283 : vector<8x4xf32>
    %285 = arith.addf %280, %284 : vector<8x4xf32>
    %286 = vector.extract_strided_slice %262 {offsets = [0, 2], sizes = [8, 1], strides = [1, 1]} : vector<8x4xf32> to vector<8x1xf32>
    %287 = vector.broadcast %286 : vector<8x1xf32> to vector<8x4xf32>
    %288 = vector.broadcast %34 : vector<1x4xf32> to vector<8x4xf32>
    %289 = arith.mulf %287, %288 : vector<8x4xf32>
    %290 = arith.addf %285, %289 : vector<8x4xf32>
    %291 = vector.extract_strided_slice %262 {offsets = [0, 3], sizes = [8, 1], strides = [1, 1]} : vector<8x4xf32> to vector<8x1xf32>
    %292 = vector.broadcast %291 : vector<8x1xf32> to vector<8x4xf32>
    %293 = vector.broadcast %35 : vector<1x4xf32> to vector<8x4xf32>
    %294 = arith.mulf %292, %293 : vector<8x4xf32>
    %295 = arith.addf %290, %294 : vector<8x4xf32>
    %296 = arith.addf %276, %295 : vector<8x4xf32>
    %297 = vector.broadcast %272 : vector<8x1xf32> to vector<8x4xf32>
    %298 = vector.broadcast %36 : vector<1x4xf32> to vector<8x4xf32>
    %299 = arith.mulf %297, %298 : vector<8x4xf32>
    %300 = arith.addf %296, %299 : vector<8x4xf32>
    %301 = arith.addf %262, %300 : vector<8x4xf32>
    %302 = math.absf %300 : vector<8x4xf32>
    %cst_38 = arith.constant 1.000000e-03 : f32
    %303 = vector.broadcast %cst_38 : f32 to vector<8x4xf32>
    %304 = arith.mulf %303, %302 : vector<8x4xf32>
    %305 = arith.addf %300, %304 : vector<8x4xf32>
    %306 = arith.mulf %305, %274 : vector<8x4xf32>
    %cst_39 = arith.constant dense<0.000000e+00> : vector<8xf32>
    %307 = vector.multi_reduction <add>, %306, %cst_39 [1] : vector<8x4xf32> to vector<8xf32>
    %308 = vector.shape_cast %307 : vector<8xf32> to vector<8x1xf32>
    %cst_40 = arith.constant 1.000000e+00 : f32
    %309 = vector.broadcast %cst_40 : f32 to vector<8x1xf32>
    %310 = arith.mulf %272, %309 : vector<8x1xf32>
    %311 = arith.subf %310, %308 : vector<8x1xf32>
    %312 = vector.extract_strided_slice %0 {offsets = [0, 7, 0], sizes = [8, 1, 4], strides = [1, 1, 1]} : vector<8x8x4xf32> to vector<8x1x4xf32>
    %313 = vector.shape_cast %312 : vector<8x1x4xf32> to vector<8x4xf32>
    %314 = vector.extract_strided_slice %31 {offsets = [0, 7, 0], sizes = [8, 1, 4], strides = [1, 1, 1]} : vector<8x8x4xf32> to vector<8x1x4xf32>
    %315 = vector.shape_cast %314 : vector<8x1x4xf32> to vector<8x4xf32>
    %316 = vector.extract_strided_slice %301 {offsets = [0, 0], sizes = [8, 1], strides = [1, 1]} : vector<8x4xf32> to vector<8x1xf32>
    %317 = vector.broadcast %316 : vector<8x1xf32> to vector<8x4xf32>
    %318 = vector.broadcast %32 : vector<1x4xf32> to vector<8x4xf32>
    %319 = arith.mulf %317, %318 : vector<8x4xf32>
    %320 = vector.extract_strided_slice %301 {offsets = [0, 1], sizes = [8, 1], strides = [1, 1]} : vector<8x4xf32> to vector<8x1xf32>
    %321 = vector.broadcast %320 : vector<8x1xf32> to vector<8x4xf32>
    %322 = vector.broadcast %33 : vector<1x4xf32> to vector<8x4xf32>
    %323 = arith.mulf %321, %322 : vector<8x4xf32>
    %324 = arith.addf %319, %323 : vector<8x4xf32>
    %325 = vector.extract_strided_slice %301 {offsets = [0, 2], sizes = [8, 1], strides = [1, 1]} : vector<8x4xf32> to vector<8x1xf32>
    %326 = vector.broadcast %325 : vector<8x1xf32> to vector<8x4xf32>
    %327 = vector.broadcast %34 : vector<1x4xf32> to vector<8x4xf32>
    %328 = arith.mulf %326, %327 : vector<8x4xf32>
    %329 = arith.addf %324, %328 : vector<8x4xf32>
    %330 = vector.extract_strided_slice %301 {offsets = [0, 3], sizes = [8, 1], strides = [1, 1]} : vector<8x4xf32> to vector<8x1xf32>
    %331 = vector.broadcast %330 : vector<8x1xf32> to vector<8x4xf32>
    %332 = vector.broadcast %35 : vector<1x4xf32> to vector<8x4xf32>
    %333 = arith.mulf %331, %332 : vector<8x4xf32>
    %334 = arith.addf %329, %333 : vector<8x4xf32>
    %335 = arith.addf %315, %334 : vector<8x4xf32>
    %336 = vector.broadcast %311 : vector<8x1xf32> to vector<8x4xf32>
    %337 = vector.broadcast %36 : vector<1x4xf32> to vector<8x4xf32>
    %338 = arith.mulf %336, %337 : vector<8x4xf32>
    %339 = arith.addf %335, %338 : vector<8x4xf32>
    %340 = arith.addf %301, %339 : vector<8x4xf32>
    %341 = math.absf %339 : vector<8x4xf32>
    %cst_41 = arith.constant 1.000000e-03 : f32
    %342 = vector.broadcast %cst_41 : f32 to vector<8x4xf32>
    %343 = arith.mulf %342, %341 : vector<8x4xf32>
    %344 = arith.addf %339, %343 : vector<8x4xf32>
    %345 = arith.mulf %344, %313 : vector<8x4xf32>
    %cst_42 = arith.constant dense<0.000000e+00> : vector<8xf32>
    %346 = vector.multi_reduction <add>, %345, %cst_42 [1] : vector<8x4xf32> to vector<8xf32>
    %347 = vector.shape_cast %346 : vector<8xf32> to vector<8x1xf32>
    %cst_43 = arith.constant 1.000000e+00 : f32
    %348 = vector.broadcast %cst_43 : f32 to vector<8x1xf32>
    %349 = arith.mulf %311, %348 : vector<8x1xf32>
    %350 = arith.subf %349, %347 : vector<8x1xf32>
    %351 = vector.extract_strided_slice %0 {offsets = [0, 7, 0], sizes = [8, 1, 4], strides = [1, 1, 1]} : vector<8x8x4xf32> to vector<8x1x4xf32>
    %352 = vector.shape_cast %351 : vector<8x1x4xf32> to vector<8x4xf32>
    %353 = arith.mulf %340, %352 : vector<8x4xf32>
    %cst_44 = arith.constant dense<0.000000e+00> : vector<8xf32>
    %354 = vector.multi_reduction <add>, %353, %cst_44 [1] : vector<8x4xf32> to vector<8xf32>
    %355 = vector.shape_cast %354 : vector<8xf32> to vector<8x1xf32>
    %356 = arith.addf %355, %350 : vector<8x1xf32>
    %c0_45 = arith.constant 0 : index
    %c0_46 = arith.constant 0 : index
    %357 = vector.load %arg6[%c0_45, %c0_46] : memref<8x1xf32, #tpu.memory_space<vmem>>, vector<8x1xf32>
    tpu.vector_store %arg6[%c0_45, %c0_46], %356 {strides = array<i32>} : memref<8x1xf32, #tpu.memory_space<vmem>>, vector<8x1xf32>,
    return
  }
  func.func @transform_0(%arg0: i32) -> (i32, i32, i32) {
    %c0_i32 = arith.constant 0 : i32
    %c0_i32_0 = arith.constant 0 : i32
    %c0_i32_1 = arith.constant 0 : i32
    return %arg0, %c0_i32, %c0_i32_0 : i32, i32, i32
  }
  func.func @transform_1(%arg0: i32) -> (i32, i32) {
    %c0_i32 = arith.constant 0 : i32
    %c0_i32_0 = arith.constant 0 : i32
    %c0_i32_1 = arith.constant 0 : i32
    return %c0_i32, %c0_i32_0 : i32, i32
  }
  func.func @transform_2(%arg0: i32) -> (i32, i32) {
    %c0_i32 = arith.constant 0 : i32
    %c0_i32_0 = arith.constant 0 : i32
    %c0_i32_1 = arith.constant 0 : i32
    return %c0_i32, %c0_i32_0 : i32, i32
  }
  func.func @transform_3(%arg0: i32) -> (i32, i32) {
    %c0_i32 = arith.constant 0 : i32
    %c0_i32_0 = arith.constant 0 : i32
    %c0_i32_1 = arith.constant 0 : i32
    return %c0_i32, %c0_i32_0 : i32, i32
  }
  func.func @transform_4(%arg0: i32) -> (i32, i32) {
    %c0_i32 = arith.constant 0 : i32
    %c0_i32_0 = arith.constant 0 : i32
    %c0_i32_1 = arith.constant 0 : i32
    return %c0_i32, %c0_i32_0 : i32, i32
  }
  func.func @transform_5(%arg0: i32) -> (i32, i32) {
    %c0_i32 = arith.constant 0 : i32
    %c0_i32_0 = arith.constant 0 : i32
    return %arg0, %c0_i32 : i32, i32
  }
}

</mosaic_0001>

<llo_original>
// kernel: tpu_custom_call.1
$region0: #{tpu_custom_call.1}
  #allocation0 [shape = 'u32[]', space=smem, size = 0x4, offset = 0x4, fixed_abs, tag = 'smem constant byte address 0x4 - core index']
  #allocation1 [shape = 'u32[144,128]{1,0:T(1,128)}', space=vmem, size = 0x12000, scoped, tag = 'internal scratch']
  #allocation2 [shape = 'f32[8,8,4]{2,1,0:T(8,128)}', space=vmem, size = 0x8000, scoped, tag = 'scratch operand']
  %s0 = inlined_call_operand.vmem [shape: f32[16,8,4], index: 0, kind: input, shape index: {}]
  %s1 = inlined_call_operand.vmem [shape: f32[4,4], index: 1, kind: input, shape index: {}]
  %s2 = inlined_call_operand.vmem [shape: f32[4,4], index: 2, kind: input, shape index: {}]
  %s3 = inlined_call_operand.vmem [shape: f32[1,4], index: 3, kind: input, shape index: {}]
  %s4 = inlined_call_operand.vmem [shape: f32[1,4], index: 4, kind: input, shape index: {}]
  %s5 = inlined_call_operand.vmem [shape: f32[16,1], index: 5, kind: output, shape index: {}]
  %s6 = sld [smem:[#allocation0]]
  $region53: #{tpu_custom_call.1} parent=0
    _
  %s8 = ssub.s32 1, %s6
  %s9 = scalar_select 0, %s8, %s6
  loop: start=0, step=1, limit=4
  $region2: #{tpu_custom_call.1} parent=0 // loop_pre_header
    _
  $region3: #{tpu_custom_call.1} parent=0 // loop_header
    %s11 = sphi 0, %s15
    %p12 = scmp.ge.s32.totalorder %s11, 4
    %s21 = sphi 0, %s23
    %s24 = sphi 0, %s21
    %s25 = sphi 0, %s24
    %s41 = sphi 0, %s25
    %s45 = sphi 0, %s45
    %s47 = sphi 0, %s45
    %s48 = sphi 0, %s47
    %s62 = sphi 0, %s48
    %s66 = sphi 0, %s66
    %s68 = sphi 0, %s66
    %s69 = sphi 0, %s68
    %s83 = sphi 0, %s69
    %s87 = sphi 0, %s87
    %s89 = sphi 0, %s87
    %s90 = sphi 0, %s89
    %s104 = sphi 0, %s90
    %s108 = sphi 0, %s108
    %s110 = sphi 0, %s108
    %s111 = sphi 0, %s110
    %s125 = sphi 0, %s111
    %s131 = sphi 0, %s133
    %s134 = sphi 0, %s131
    %s135 = sphi 0, %s134
    %s151 = sphi 0, %s135
  $region4: #{tpu_custom_call.1} parent=0 // loop_header_branch
    %14 = sbr.rel (%p12) target = $region8
  $region5: #{tpu_custom_call.1} parent=0 // loop_body
    %s16 = ssub.s32 %s11, 1
    %s17 = ssub.s32 %s11, 2
    %s18 = sadd.s32 %s11, 1
    %s19 = ssub.s32 %s11, %s18
    %p20 = scmp.eq.s32.totalorder %s19, 0
    %s22 = sadd.s32 %s21, 1
    %s23 = scalar_select %p20, %s21, %s22
    %p26 = pneg %p20
    %p27 = scmp.eq.s32.totalorder %s11, 1
    %p28 = por %p26, %p27
    %p29 = scmp.ne.s32.totalorder %s21, %s24
    %p30 = scmp.eq.s32.totalorder %s11, 0
    %p31 = por %p29, %p30
    %p32 = scmp.ne.s32.totalorder %s21, %s24
    %p33 = scmp.eq.s32.totalorder %s16, 1
    %p34 = por %p32, %p33
    %p35 = scmp.ne.s32.totalorder %s24, %s25
    %p36 = scmp.eq.s32.totalorder %s16, 0
    %p37 = por %p35, %p36
    %p38 = scmp.ne.s32.totalorder %s24, %s25
    %p39 = scmp.eq.s32.totalorder %s17, 1
    %p40 = por %p38, %p39
    %p42 = scmp.ne.s32.totalorder %s25, %s41
    %p43 = scmp.eq.s32.totalorder %s17, 0
    %p44 = por %p42, %p43
    %s46 = sadd.s32 %s45, 1
    %p49 = scmp.eq.s32.totalorder %s11, 1
    %p50 = scmp.ne.s32.totalorder %s45, %s47
    %p51 = scmp.eq.s32.totalorder %s11, 0
    %p52 = por %p50, %p51
    %p53 = scmp.ne.s32.totalorder %s45, %s47
    %p54 = scmp.eq.s32.totalorder %s16, 1
    %p55 = por %p53, %p54
    %p56 = scmp.ne.s32.totalorder %s47, %s48
    %p57 = scmp.eq.s32.totalorder %s16, 0
    %p58 = por %p56, %p57
    %p59 = scmp.ne.s32.totalorder %s47, %s48
    %p60 = scmp.eq.s32.totalorder %s17, 1
    %p61 = por %p59, %p60
    %p63 = scmp.ne.s32.totalorder %s48, %s62
    %p64 = scmp.eq.s32.totalorder %s17, 0
    %p65 = por %p63, %p64
    %s67 = sadd.s32 %s66, 1
    %p70 = scmp.eq.s32.totalorder %s11, 1
    %p71 = scmp.ne.s32.totalorder %s66, %s68
    %p72 = scmp.eq.s32.totalorder %s11, 0
    %p73 = por %p71, %p72
    %p74 = scmp.ne.s32.totalorder %s66, %s68
    %p75 = scmp.eq.s32.totalorder %s16, 1
    %p76 = por %p74, %p75
    %p77 = scmp.ne.s32.totalorder %s68, %s69
    %p78 = scmp.eq.s32.totalorder %s16, 0
    %p79 = por %p77, %p78
    %p80 = scmp.ne.s32.totalorder %s68, %s69
    %p81 = scmp.eq.s32.totalorder %s17, 1
    %p82 = por %p80, %p81
    %p84 = scmp.ne.s32.totalorder %s69, %s83
    %p85 = scmp.eq.s32.totalorder %s17, 0
    %p86 = por %p84, %p85
    %s88 = sadd.s32 %s87, 1
    %p91 = scmp.eq.s32.totalorder %s11, 1
    %p92 = scmp.ne.s32.totalorder %s87, %s89
    %p93 = scmp.eq.s32.totalorder %s11, 0
    %p94 = por %p92, %p93
    %p95 = scmp.ne.s32.totalorder %s87, %s89
    %p96 = scmp.eq.s32.totalorder %s16, 1
    %p97 = por %p95, %p96
    %p98 = scmp.ne.s32.totalorder %s89, %s90
    %p99 = scmp.eq.s32.totalorder %s16, 0
    %p100 = por %p98, %p99
    %p101 = scmp.ne.s32.totalorder %s89, %s90
    %p102 = scmp.eq.s32.totalorder %s17, 1
    %p103 = por %p101, %p102
    %p105 = scmp.ne.s32.totalorder %s90, %s104
    %p106 = scmp.eq.s32.totalorder %s17, 0
    %p107 = por %p105, %p106
    %s109 = sadd.s32 %s108, 1
    %p112 = scmp.eq.s32.totalorder %s11, 1
    %p113 = scmp.ne.s32.totalorder %s108, %s110
    %p114 = scmp.eq.s32.totalorder %s11, 0
    %p115 = por %p113, %p114
    %p116 = scmp.ne.s32.totalorder %s108, %s110
    %p117 = scmp.eq.s32.totalorder %s16, 1
    %p118 = por %p116, %p117
    %p119 = scmp.ne.s32.totalorder %s110, %s111
    %p120 = scmp.eq.s32.totalorder %s16, 0
    %p121 = por %p119, %p120
    %p122 = scmp.ne.s32.totalorder %s110, %s111
    %p123 = scmp.eq.s32.totalorder %s17, 1
    %p124 = por %p122, %p123
    %p126 = scmp.ne.s32.totalorder %s111, %s125
    %p127 = scmp.eq.s32.totalorder %s17, 0
    %p128 = por %p126, %p127
    %s129 = ssub.s32 %s11, %s18
    %p130 = scmp.eq.s32.totalorder %s129, 0
    %s132 = sadd.s32 %s131, 1
    %s133 = scalar_select %p130, %s131, %s132
    %p136 = pneg %p130
    %p137 = scmp.eq.s32.totalorder %s11, 1
    %p138 = por %p136, %p137
    %p139 = scmp.ne.s32.totalorder %s131, %s134
    %p140 = scmp.eq.s32.totalorder %s11, 0
    %p141 = por %p139, %p140
    %p142 = scmp.ne.s32.totalorder %s131, %s134
    %p143 = scmp.eq.s32.totalorder %s16, 1
    %p144 = por %p142, %p143
    %p145 = scmp.ne.s32.totalorder %s134, %s135
    %p146 = scmp.eq.s32.totalorder %s16, 0
    %p147 = por %p145, %p146
    %p148 = scmp.ne.s32.totalorder %s134, %s135
    %p149 = scmp.eq.s32.totalorder %s17, 1
    %p150 = por %p148, %p149
    %p152 = scmp.ne.s32.totalorder %s135, %s151
    %p153 = scmp.eq.s32.totalorder %s17, 0
    %p154 = por %p152, %p153
    %p155 = scmp.le.s32.totalorder 1, %s11
    %p156 = scmp.lt.s32.totalorder %s11, 3
    %p157 = pnand %p155, %p156
    %p158 = pneg %p157
    // Predicated region
    $region9: #{tpu_custom_call.1} parent=5 // pred_check
      _
    $region10: #{tpu_custom_call.1} parent=5 // pred_check_branch
      %160 = sbr.rel (%p157) target = $region12
    $region11: #{tpu_custom_call.1} parent=5 // pred_region
      %s161 = ssub.s32 %s11, 1
      // Predicated region
      $region13: #{tpu_custom_call.1} parent=11 // pred_check
        %p162 = pneg %p58
      $region14: #{tpu_custom_call.1} parent=11 // pred_check_branch
        %164 = sbr.rel (%p162) target = $region16
      $region15: #{tpu_custom_call.1} parent=11 // pred_region
        _
      $region16: #{tpu_custom_call.1} parent=11 // pred_fallthru
        _
      // Predicated region
      $region17: #{tpu_custom_call.1} parent=11 // pred_check
        %p165 = pneg %p79
      $region18: #{tpu_custom_call.1} parent=11 // pred_check_branch
        %167 = sbr.rel (%p165) target = $region20
      $region19: #{tpu_custom_call.1} parent=11 // pred_region
        _
      $region20: #{tpu_custom_call.1} parent=11 // pred_fallthru
        _
      // Predicated region
      $region21: #{tpu_custom_call.1} parent=11 // pred_check
        %p168 = pneg %p100
      $region22: #{tpu_custom_call.1} parent=11 // pred_check_branch
        %170 = sbr.rel (%p168) target = $region24
      $region23: #{tpu_custom_call.1} parent=11 // pred_region
        _
      $region24: #{tpu_custom_call.1} parent=11 // pred_fallthru
        _
      // Predicated region
      $region25: #{tpu_custom_call.1} parent=11 // pred_check
        %p171 = pneg %p121
      $region26: #{tpu_custom_call.1} parent=11 // pred_check_branch
        %173 = sbr.rel (%p171) target = $region28
      $region27: #{tpu_custom_call.1} parent=11 // pred_region
        _
      $region28: #{tpu_custom_call.1} parent=11 // pred_fallthru
        _
    $region12: #{tpu_custom_call.1} parent=5 // pred_fallthru
      _
    %p174 = scmp.lt.s32.totalorder %s11, 2
    // Predicated region
    $region29: #{tpu_custom_call.1} parent=5 // pred_check
      %p175 = pneg %p174
    $region30: #{tpu_custom_call.1} parent=5 // pred_check_branch
      %177 = sbr.rel (%p175) target = $region32
    $region31: #{tpu_custom_call.1} parent=5 // pred_region
      // Predicated region
      $region33: #{tpu_custom_call.1} parent=31 // pred_check
        %p178 = pneg %p31
      $region34: #{tpu_custom_call.1} parent=31 // pred_check_branch
        %180 = sbr.rel (%p178) target = $region36
      $region35: #{tpu_custom_call.1} parent=31 // pred_region
        %s181 = smul.u32 8, %s11
        %p182 = scmp.lt.s32.totalorder %s181, 15
        %s183 = scalar_select %p182, %s181, 15
        %s184 = smul.addr %s183, 8
        %s185 = scalar_lea.vmem %s0, %s184
        %s186 = smul.u32 8, %s11
      $region36: #{tpu_custom_call.1} parent=31 // pred_fallthru
        _
    $region32: #{tpu_custom_call.1} parent=5 // pred_fallthru
      _
    %p187 = scmp.le.s32.totalorder 1, %s11
    %p188 = scmp.lt.s32.totalorder %s11, 3
    %p189 = pnand %p187, %p188
    %p190 = pneg %p189
    // Predicated region
    $region37: #{tpu_custom_call.1} parent=5 // pred_check
      _
    $region38: #{tpu_custom_call.1} parent=5 // pred_check_branch
      %192 = sbr.rel (%p189) target = $region40
    $region39: #{tpu_custom_call.1} parent=5 // pred_region
      %s193 = ssub.s32 %s11, 1
      %s194 = smul.u32 8, %s16
      %p195 = scmp.lt.s32.totalorder %s194, 15
      %s196 = scalar_select %p195, %s194, 15
      %s197 = smul.addr %s196, 8
      %s198 = scalar_lea.vmem %s0, %s197
      %p199 = pneg %p37
      %p200 = pneg %p34
      %p201 = pneg %p58
      %p202 = pneg %p55
      %p203 = pneg %p79
      %p204 = pneg %p76
      %p205 = pneg %p100
      %p206 = pneg %p97
      %p207 = pneg %p121
      %p208 = pneg %p118
      %p209 = pneg %p147
      %p210 = pneg %p144
      %p211 = scmp.lt.s32.totalorder %s16, 1
      %s212 = scalar_select %p211, %s16, 1
      %s213 = smul.addr %s212, 8
      %s214 = scalar_lea.vmem %s5, %s213
      %s215 = smul.u32 8, %s16
      %p216 = scmp.lt.s32.totalorder %s215, 15
      %s217 = scalar_select %p216, %s215, 15
      %s218 = smul.addr %s217, 8
      %s219 = scalar_lea.vmem %s0, %s218
      %s220 = smul.u32 8, %s16
      %p221 = scmp.lt.s32.totalorder %s16, 1
      %s222 = scalar_select %p221, %s16, 1
      %s223 = smul.addr %s222, 8
      %s224 = scalar_lea.vmem %s5, %s223
      %v225 = vld [vmem:[%s219] sm:$0xff]
      %v226 = vld [vmem:[%s219 + $0x8] sm:$0xff]
      %v227 = vld [vmem:[%s219 + $0x10] sm:$0xff]
      %v228 = vld [vmem:[%s219 + $0x18] sm:$0xff]
      %v229 = vld [vmem:[%s219 + $0x20] sm:$0xff]
      %v230 = vld [vmem:[%s219 + $0x28] sm:$0xff]
      %v231 = vld [vmem:[%s219 + $0x30] sm:$0xff]
      %v232 = vld [vmem:[%s219 + $0x38] sm:$0xff]
      %v233 = vld [vmem:[%s1] sm:$0x1]
      %235 = vset.pattern.permute.xlu0 0
      %236 = vperm.xlu0 %235, %v225
      %v237 = vpop.permute.xlu0 %236
      %240 = vset.pattern.permute.xlu0 0
      %241 = vperm.xlu0 %240, %v226
      %v242 = vpop.permute.xlu0 %241
      %245 = vset.pattern.permute.xlu0 0
      %246 = vperm.xlu0 %245, %v227
      %v247 = vpop.permute.xlu0 %246
      %250 = vset.pattern.permute.xlu0 0
      %251 = vperm.xlu0 %250, %v228
      %v252 = vpop.permute.xlu0 %251
      %255 = vset.pattern.permute.xlu0 0
      %256 = vperm.xlu0 %255, %v229
      %v257 = vpop.permute.xlu0 %256
      %260 = vset.pattern.permute.xlu0 0
      %261 = vperm.xlu0 %260, %v230
      %v262 = vpop.permute.xlu0 %261
      %265 = vset.pattern.permute.xlu0 0
      %266 = vperm.xlu0 %265, %v231
      %v267 = vpop.permute.xlu0 %266
      %270 = vset.pattern.permute.xlu0 0
      %271 = vperm.xlu0 %270, %v232
      %v272 = vpop.permute.xlu0 %271
      %v274 = vlaneseq
      %v275 = vshrl.u32 %v274, 7
      %v276 = vsub.s32 0, %v275
      %v277 = vrot.slane %v233, %v276
      %v278 = vmul.f32 %v237, %v277
      %v279 = vmul.f32 %v242, %v277
      %v280 = vmul.f32 %v247, %v277
      %v281 = vmul.f32 %v252, %v277
      %v282 = vmul.f32 %v257, %v277
      %v283 = vmul.f32 %v262, %v277
      %v284 = vmul.f32 %v267, %v277
      %v285 = vmul.f32 %v272, %v277
      %v286 = vld [vmem:[%s4] sm:$0x1]
      %v288 = vlaneseq
      %v289 = vshrl.u32 %v288, 7
      %v290 = vsub.s32 0, %v289
      %v291 = vrot.slane %v286, %v290
      %v293 = vadd.f32 %v278, %v291
      %v294 = vadd.f32 %v279, %v291
      %v295 = vadd.f32 %v280, %v291
      %v296 = vadd.f32 %v281, %v291
      %v297 = vadd.f32 %v282, %v291
      %v298 = vadd.f32 %v283, %v291
      %v299 = vadd.f32 %v284, %v291
      %v300 = vadd.f32 %v285, %v291
      %v301 = vld [vmem:[%s1 + $0x1] sm:$0x1]
      %302 = vset.pattern.permute.xlu0 1
      %303 = vperm.xlu0 %302, %v225
      %v304 = vpop.permute.xlu0 %303
      %306 = vset.pattern.permute.xlu0 1
      %307 = vperm.xlu0 %306, %v226
      %v308 = vpop.permute.xlu0 %307
      %310 = vset.pattern.permute.xlu0 1
      %311 = vperm.xlu0 %310, %v227
      %v312 = vpop.permute.xlu0 %311
      %314 = vset.pattern.permute.xlu0 1
      %315 = vperm.xlu0 %314, %v228
      %v316 = vpop.permute.xlu0 %315
      %318 = vset.pattern.permute.xlu0 1
      %319 = vperm.xlu0 %318, %v229
      %v320 = vpop.permute.xlu0 %319
      %322 = vset.pattern.permute.xlu0 1
      %323 = vperm.xlu0 %322, %v230
      %v324 = vpop.permute.xlu0 %323
      %326 = vset.pattern.permute.xlu0 1
      %327 = vperm.xlu0 %326, %v231
      %v328 = vpop.permute.xlu0 %327
      %330 = vset.pattern.permute.xlu0 1
      %331 = vperm.xlu0 %330, %v232
      %v332 = vpop.permute.xlu0 %331
      %v334 = vlaneseq
      %v335 = vshrl.u32 %v334, 7
      %v336 = vsub.s32 0, %v335
      %v337 = vrot.slane %v301, %v336
      %v338 = vmul.f32 %v304, %v337
      %v339 = vmul.f32 %v308, %v337
      %v340 = vmul.f32 %v312, %v337
      %v341 = vmul.f32 %v316, %v337
      %v342 = vmul.f32 %v320, %v337
      %v343 = vmul.f32 %v324, %v337
      %v344 = vmul.f32 %v328, %v337
      %v345 = vmul.f32 %v332, %v337
      %v346 = vadd.f32 %v293, %v338
      %v347 = vadd.f32 %v294, %v339
      %v348 = vadd.f32 %v295, %v340
      %v349 = vadd.f32 %v296, %v341
      %v350 = vadd.f32 %v297, %v342
      %v351 = vadd.f32 %v298, %v343
      %v352 = vadd.f32 %v299, %v344
      %v353 = vadd.f32 %v300, %v345
      %v354 = vld [vmem:[%s1 + $0x2] sm:$0x1]
      %355 = vset.pattern.permute.xlu0 2
      %356 = vperm.xlu0 %355, %v225
      %v357 = vpop.permute.xlu0 %356
      %359 = vset.pattern.permute.xlu0 2
      %360 = vperm.xlu0 %359, %v226
      %v361 = vpop.permute.xlu0 %360
      %363 = vset.pattern.permute.xlu0 2
      %364 = vperm.xlu0 %363, %v227
      %v365 = vpop.permute.xlu0 %364
      %367 = vset.pattern.permute.xlu0 2
      %368 = vperm.xlu0 %367, %v228
      %v369 = vpop.permute.xlu0 %368
      %371 = vset.pattern.permute.xlu0 2
      %372 = vperm.xlu0 %371, %v229
      %v373 = vpop.permute.xlu0 %372
      %375 = vset.pattern.permute.xlu0 2
      %376 = vperm.xlu0 %375, %v230
      %v377 = vpop.permute.xlu0 %376
      %379 = vset.pattern.permute.xlu0 2
      %380 = vperm.xlu0 %379, %v231
      %v381 = vpop.permute.xlu0 %380
      %383 = vset.pattern.permute.xlu0 2
      %384 = vperm.xlu0 %383, %v232
      %v385 = vpop.permute.xlu0 %384
      %v387 = vlaneseq
      %v388 = vshrl.u32 %v387, 7
      %v389 = vsub.s32 0, %v388
      %v390 = vrot.slane %v354, %v389
      %v391 = vmul.f32 %v357, %v390
      %v392 = vmul.f32 %v361, %v390
      %v393 = vmul.f32 %v365, %v390
      %v394 = vmul.f32 %v369, %v390
      %v395 = vmul.f32 %v373, %v390
      %v396 = vmul.f32 %v377, %v390
      %v397 = vmul.f32 %v381, %v390
      %v398 = vmul.f32 %v385, %v390
      %v399 = vadd.f32 %v346, %v391
      %v400 = vadd.f32 %v347, %v392
      %v401 = vadd.f32 %v348, %v393
      %v402 = vadd.f32 %v349, %v394
      %v403 = vadd.f32 %v350, %v395
      %v404 = vadd.f32 %v351, %v396
      %v405 = vadd.f32 %v352, %v397
      %v406 = vadd.f32 %v353, %v398
      %v407 = vld [vmem:[%s1 + $0x3] sm:$0x1]
      %408 = vset.pattern.permute.xlu0 3
      %409 = vperm.xlu0 %408, %v225
      %v410 = vpop.permute.xlu0 %409
      %412 = vset.pattern.permute.xlu0 3
      %413 = vperm.xlu0 %412, %v226
      %v414 = vpop.permute.xlu0 %413
      %416 = vset.pattern.permute.xlu0 3
      %417 = vperm.xlu0 %416, %v227
      %v418 = vpop.permute.xlu0 %417
      %420 = vset.pattern.permute.xlu0 3
      %421 = vperm.xlu0 %420, %v228
      %v422 = vpop.permute.xlu0 %421
      %424 = vset.pattern.permute.xlu0 3
      %425 = vperm.xlu0 %424, %v229
      %v426 = vpop.permute.xlu0 %425
      %428 = vset.pattern.permute.xlu0 3
      %429 = vperm.xlu0 %428, %v230
      %v430 = vpop.permute.xlu0 %429
      %432 = vset.pattern.permute.xlu0 3
      %433 = vperm.xlu0 %432, %v231
      %v434 = vpop.permute.xlu0 %433
      %436 = vset.pattern.permute.xlu0 3
      %437 = vperm.xlu0 %436, %v232
      %v438 = vpop.permute.xlu0 %437
      %v440 = vlaneseq
      %v441 = vshrl.u32 %v440, 7
      %v442 = vsub.s32 0, %v441
      %v443 = vrot.slane %v407, %v442
      %v444 = vmul.f32 %v410, %v443
      %v445 = vmul.f32 %v414, %v443
      %v446 = vmul.f32 %v418, %v443
      %v447 = vmul.f32 %v422, %v443
      %v448 = vmul.f32 %v426, %v443
      %v449 = vmul.f32 %v430, %v443
      %v450 = vmul.f32 %v434, %v443
      %v451 = vmul.f32 %v438, %v443
      %v452 = vadd.f32 %v399, %v444
      %v453 = vadd.f32 %v400, %v445
      %v454 = vadd.f32 %v401, %v446
      %v455 = vadd.f32 %v402, %v447
      %v456 = vadd.f32 %v403, %v448
      %v457 = vadd.f32 %v404, %v449
      %v458 = vadd.f32 %v405, %v450
      %v459 = vadd.f32 %v406, %v451
      %v460 = vld [vmem:[%s2] sm:$0x1]
      %v461 = vld [vmem:[%s2 + $0x1] sm:$0x1]
      %v462 = vld [vmem:[%s2 + $0x2] sm:$0x1]
      %v463 = vld [vmem:[%s2 + $0x3] sm:$0x1]
      %v464 = vld [vmem:[%s3] sm:$0x1]
      %v465 = vlaneseq
      %v466 = vshrl.u32 %v465, 7
      %v467 = vsub.s32 0, %v466
      %v468 = vrot.slane %v460, %v467
      %v469 = vmul.f32 %v468, 0.0
      %v470 = vlaneseq
      %v471 = vshrl.u32 %v470, 7
      %v472 = vsub.s32 0, %v471
      %v473 = vrot.slane %v461, %v472
      %v474 = vmul.f32 %v473, 0.0
      %v475 = vadd.f32 %v469, %v474
      %v476 = vlaneseq
      %v477 = vshrl.u32 %v476, 7
      %v478 = vsub.s32 0, %v477
      %v479 = vrot.slane %v462, %v478
      %v480 = vmul.f32 %v479, 0.0
      %v481 = vadd.f32 %v475, %v480
      %v482 = vlaneseq
      %v483 = vshrl.u32 %v482, 7
      %v484 = vsub.s32 0, %v483
      %v485 = vrot.slane %v463, %v484
      %v486 = vmul.f32 %v485, 0.0
      %v487 = vadd.f32 %v481, %v486
      %v488 = vadd.f32 %v452, %v487
      %v489 = vadd.f32 %v453, %v487
      %v490 = vadd.f32 %v454, %v487
      %v491 = vadd.f32 %v455, %v487
      %v492 = vadd.f32 %v456, %v487
      %v493 = vadd.f32 %v457, %v487
      %v494 = vadd.f32 %v458, %v487
      %v495 = vadd.f32 %v459, %v487
      %v497 = vlaneseq
      %v498 = vshrl.u32 %v497, 7
      %v499 = vsub.s32 0, %v498
      %v500 = vrot.slane %v464, %v499
      %v502 = vmul.f32 %v500, 0.0
      %v503 = vadd.f32 %v488, %v502
      %v504 = vadd.f32 %v489, %v502
      %v505 = vadd.f32 %v490, %v502
      %v506 = vadd.f32 %v491, %v502
      %v507 = vadd.f32 %v492, %v502
      %v508 = vadd.f32 %v493, %v502
      %v509 = vadd.f32 %v494, %v502
      %v510 = vadd.f32 %v495, %v502
      %v511 = vadd.f32 %v503, 0.0
      %v512 = vadd.f32 %v504, 0.0
      %v513 = vadd.f32 %v505, 0.0
      %v514 = vadd.f32 %v506, 0.0
      %v515 = vadd.f32 %v507, 0.0
      %v516 = vadd.f32 %v508, 0.0
      %v517 = vadd.f32 %v509, 0.0
      %v518 = vadd.f32 %v510, 0.0
      %v519 = vand.u32 2147483647, %v503
      %v520 = vand.u32 2147483647, %v504
      %v521 = vand.u32 2147483647, %v505
      %v522 = vand.u32 2147483647, %v506
      %v523 = vand.u32 2147483647, %v507
      %v524 = vand.u32 2147483647, %v508
      %v525 = vand.u32 2147483647, %v509
      %v526 = vand.u32 2147483647, %v510
      %v527 = vmul.f32 %v519, 0.001
      %v528 = vmul.f32 %v520, 0.001
      %v529 = vmul.f32 %v521, 0.001
      %v530 = vmul.f32 %v522, 0.001
      %v531 = vmul.f32 %v523, 0.001
      %v532 = vmul.f32 %v524, 0.001
      %v533 = vmul.f32 %v525, 0.001
      %v534 = vmul.f32 %v526, 0.001
      %v535 = vadd.f32 %v503, %v527
      %v536 = vadd.f32 %v504, %v528
      %v537 = vadd.f32 %v505, %v529
      %v538 = vadd.f32 %v506, %v530
      %v539 = vadd.f32 %v507, %v531
      %v540 = vadd.f32 %v508, %v532
      %v541 = vadd.f32 %v509, %v533
      %v542 = vadd.f32 %v510, %v534
      %v543 = vmul.f32 %v535, %v225
      %v544 = vmul.f32 %v536, %v226
      %v545 = vmul.f32 %v537, %v227
      %v546 = vmul.f32 %v538, %v228
      %v547 = vmul.f32 %v539, %v229
      %v548 = vmul.f32 %v540, %v230
      %v549 = vmul.f32 %v541, %v231
      %v550 = vmul.f32 %v542, %v232
      %v559 = vrot.slane %v544, 7
      %vm560 = vcmask 1041409
      %v561 = vsel %vm560, %v559, %v543
      %v562 = vrot.slane %v545, 6
      %vm563 = vcmask 1042434
      %v564 = vsel %vm563, %v562, %v561
      %v565 = vrot.slane %v546, 5
      %vm566 = vcmask 1043459
      %v567 = vsel %vm566, %v565, %v564
      %v568 = vrot.slane %v547, 4
      %vm569 = vcmask 1044484
      %v570 = vsel %vm569, %v568, %v567
      %v571 = vrot.slane %v548, 3
      %vm572 = vcmask 1045509
      %v573 = vsel %vm572, %v571, %v570
      %v574 = vrot.slane %v549, 2
      %vm575 = vcmask 1046534
      %v576 = vsel %vm575, %v574, %v573
      %v577 = vrot.slane %v550, 1
      %vm578 = vcmask 1047559
      %v579 = vsel %vm578, %v577, %v576
      %vm581 = vcmask 31744
      %v582 = vsel %vm581, %v579, 0.0
      %583 = vadd.xlane.f32.xlu0 %v582
      %v584 = vpop.xlane.xlu0 %583
      %v585 = vsub.f32 0.0, %v584
      %587 = vset.pattern.permute.xlu0 0
      %588 = vperm.xlu0 %587, %v511
      %v589 = vpop.permute.xlu0 %588
      %592 = vset.pattern.permute.xlu0 0
      %593 = vperm.xlu0 %592, %v512
      %v594 = vpop.permute.xlu0 %593
      %597 = vset.pattern.permute.xlu0 0
      %598 = vperm.xlu0 %597, %v513
      %v599 = vpop.permute.xlu0 %598
      %602 = vset.pattern.permute.xlu0 0
      %603 = vperm.xlu0 %602, %v514
      %v604 = vpop.permute.xlu0 %603
      %607 = vset.pattern.permute.xlu0 0
      %608 = vperm.xlu0 %607, %v515
      %v609 = vpop.permute.xlu0 %608
      %612 = vset.pattern.permute.xlu0 0
      %613 = vperm.xlu0 %612, %v516
      %v614 = vpop.permute.xlu0 %613
      %617 = vset.pattern.permute.xlu0 0
      %618 = vperm.xlu0 %617, %v517
      %v619 = vpop.permute.xlu0 %618
      %622 = vset.pattern.permute.xlu0 0
      %623 = vperm.xlu0 %622, %v518
      %v624 = vpop.permute.xlu0 %623
      %v626 = vmul.f32 %v589, %v468
      %v627 = vmul.f32 %v594, %v468
      %v628 = vmul.f32 %v599, %v468
      %v629 = vmul.f32 %v604, %v468
      %v630 = vmul.f32 %v609, %v468
      %v631 = vmul.f32 %v614, %v468
      %v632 = vmul.f32 %v619, %v468
      %v633 = vmul.f32 %v624, %v468
      %634 = vset.pattern.permute.xlu0 1
      %635 = vperm.xlu0 %634, %v511
      %v636 = vpop.permute.xlu0 %635
      %638 = vset.pattern.permute.xlu0 1
      %639 = vperm.xlu0 %638, %v512
      %v640 = vpop.permute.xlu0 %639
      %642 = vset.pattern.permute.xlu0 1
      %643 = vperm.xlu0 %642, %v513
      %v644 = vpop.permute.xlu0 %643
      %646 = vset.pattern.permute.xlu0 1
      %647 = vperm.xlu0 %646, %v514
      %v648 = vpop.permute.xlu0 %647
      %650 = vset.pattern.permute.xlu0 1
      %651 = vperm.xlu0 %650, %v515
      %v652 = vpop.permute.xlu0 %651
      %654 = vset.pattern.permute.xlu0 1
      %655 = vperm.xlu0 %654, %v516
      %v656 = vpop.permute.xlu0 %655
      %658 = vset.pattern.permute.xlu0 1
      %659 = vperm.xlu0 %658, %v517
      %v660 = vpop.permute.xlu0 %659
      %662 = vset.pattern.permute.xlu0 1
      %663 = vperm.xlu0 %662, %v518
      %v664 = vpop.permute.xlu0 %663
      %v666 = vmul.f32 %v636, %v473
      %v667 = vmul.f32 %v640, %v473
      %v668 = vmul.f32 %v644, %v473
      %v669 = vmul.f32 %v648, %v473
      %v670 = vmul.f32 %v652, %v473
      %v671 = vmul.f32 %v656, %v473
      %v672 = vmul.f32 %v660, %v473
      %v673 = vmul.f32 %v664, %v473
      %v674 = vadd.f32 %v626, %v666
      %v675 = vadd.f32 %v627, %v667
      %v676 = vadd.f32 %v628, %v668
      %v677 = vadd.f32 %v629, %v669
      %v678 = vadd.f32 %v630, %v670
      %v679 = vadd.f32 %v631, %v671
      %v680 = vadd.f32 %v632, %v672
      %v681 = vadd.f32 %v633, %v673
      %682 = vset.pattern.permute.xlu0 2
      %683 = vperm.xlu0 %682, %v511
      %v684 = vpop.permute.xlu0 %683
      %686 = vset.pattern.permute.xlu0 2
      %687 = vperm.xlu0 %686, %v512
      %v688 = vpop.permute.xlu0 %687
      %690 = vset.pattern.permute.xlu0 2
      %691 = vperm.xlu0 %690, %v513
      %v692 = vpop.permute.xlu0 %691
      %694 = vset.pattern.permute.xlu0 2
      %695 = vperm.xlu0 %694, %v514
      %v696 = vpop.permute.xlu0 %695
      %698 = vset.pattern.permute.xlu0 2
      %699 = vperm.xlu0 %698, %v515
      %v700 = vpop.permute.xlu0 %699
      %702 = vset.pattern.permute.xlu0 2
      %703 = vperm.xlu0 %702, %v516
      %v704 = vpop.permute.xlu0 %703
      %706 = vset.pattern.permute.xlu0 2
      %707 = vperm.xlu0 %706, %v517
      %v708 = vpop.permute.xlu0 %707
      %710 = vset.pattern.permute.xlu0 2
      %711 = vperm.xlu0 %710, %v518
      %v712 = vpop.permute.xlu0 %711
      %v714 = vmul.f32 %v684, %v479
      %v715 = vmul.f32 %v688, %v479
      %v716 = vmul.f32 %v692, %v479
      %v717 = vmul.f32 %v696, %v479
      %v718 = vmul.f32 %v700, %v479
      %v719 = vmul.f32 %v704, %v479
      %v720 = vmul.f32 %v708, %v479
      %v721 = vmul.f32 %v712, %v479
      %v722 = vadd.f32 %v674, %v714
      %v723 = vadd.f32 %v675, %v715
      %v724 = vadd.f32 %v676, %v716
      %v725 = vadd.f32 %v677, %v717
      %v726 = vadd.f32 %v678, %v718
      %v727 = vadd.f32 %v679, %v719
      %v728 = vadd.f32 %v680, %v720
      %v729 = vadd.f32 %v681, %v721
      %730 = vset.pattern.permute.xlu0 3
      %731 = vperm.xlu0 %730, %v511
      %v732 = vpop.permute.xlu0 %731
      %734 = vset.pattern.permute.xlu0 3
      %735 = vperm.xlu0 %734, %v512
      %v736 = vpop.permute.xlu0 %735
      %738 = vset.pattern.permute.xlu0 3
      %739 = vperm.xlu0 %738, %v513
      %v740 = vpop.permute.xlu0 %739
      %742 = vset.pattern.permute.xlu0 3
      %743 = vperm.xlu0 %742, %v514
      %v744 = vpop.permute.xlu0 %743
      %746 = vset.pattern.permute.xlu0 3
      %747 = vperm.xlu0 %746, %v515
      %v748 = vpop.permute.xlu0 %747
      %750 = vset.pattern.permute.xlu0 3
      %751 = vperm.xlu0 %750, %v516
      %v752 = vpop.permute.xlu0 %751
      %754 = vset.pattern.permute.xlu0 3
      %755 = vperm.xlu0 %754, %v517
      %v756 = vpop.permute.xlu0 %755
      %758 = vset.pattern.permute.xlu0 3
      %759 = vperm.xlu0 %758, %v518
      %v760 = vpop.permute.xlu0 %759
      %v762 = vmul.f32 %v732, %v485
      %v763 = vmul.f32 %v736, %v485
      %v764 = vmul.f32 %v740, %v485
      %v765 = vmul.f32 %v744, %v485
      %v766 = vmul.f32 %v748, %v485
      %v767 = vmul.f32 %v752, %v485
      %v768 = vmul.f32 %v756, %v485
      %v769 = vmul.f32 %v760, %v485
      %v770 = vadd.f32 %v722, %v762
      %v771 = vadd.f32 %v723, %v763
      %v772 = vadd.f32 %v724, %v764
      %v773 = vadd.f32 %v725, %v765
      %v774 = vadd.f32 %v726, %v766
      %v775 = vadd.f32 %v727, %v767
      %v776 = vadd.f32 %v728, %v768
      %v777 = vadd.f32 %v729, %v769
      %v786 = vrot.slane %v770, 7
      %v787 = vrot.slane %v771, 7
      %v788 = vrot.slane %v772, 7
      %v789 = vrot.slane %v773, 7
      %v790 = vrot.slane %v774, 7
      %v791 = vrot.slane %v775, 7
      %v792 = vrot.slane %v776, 7
      %v793 = vrot.slane %v777, 7
      %v802 = vadd.f32 %v452, %v786
      %v803 = vadd.f32 %v453, %v787
      %v804 = vadd.f32 %v454, %v788
      %v805 = vadd.f32 %v455, %v789
      %v806 = vadd.f32 %v456, %v790
      %v807 = vadd.f32 %v457, %v791
      %v808 = vadd.f32 %v458, %v792
      %v809 = vadd.f32 %v459, %v793
      %v810 = vmul.f32 %v585, %v500
      %v812 = vrot.slane %v810, 7
      %v813 = vrot.slane %v810, 1
      %v814 = vrot.slane %v810, 2
      %v815 = vrot.slane %v810, 3
      %v816 = vrot.slane %v810, 4
      %v817 = vrot.slane %v810, 5
      %v818 = vrot.slane %v810, 6
      %v827 = vadd.f32 %v802, %v812
      %v828 = vadd.f32 %v803, %v810
      %v829 = vadd.f32 %v804, %v813
      %v830 = vadd.f32 %v805, %v814
      %v831 = vadd.f32 %v806, %v815
      %v832 = vadd.f32 %v807, %v816
      %v833 = vadd.f32 %v808, %v817
      %v834 = vadd.f32 %v809, %v818
      %v843 = vrot.slane %v827, 1
      %v844 = vrot.slane %v828, 1
      %v845 = vrot.slane %v829, 1
      %v846 = vrot.slane %v830, 1
      %v847 = vrot.slane %v831, 1
      %v848 = vrot.slane %v832, 1
      %v849 = vrot.slane %v833, 1
      %v850 = vrot.slane %v834, 1
      %v859 = vadd.f32 %v511, %v843
      %v860 = vadd.f32 %v512, %v844
      %v861 = vadd.f32 %v513, %v845
      %v862 = vadd.f32 %v514, %v846
      %v863 = vadd.f32 %v515, %v847
      %v864 = vadd.f32 %v516, %v848
      %v865 = vadd.f32 %v517, %v849
      %v866 = vadd.f32 %v518, %v850
      %v867 = vand.u32 2147483647, %v827
      %v868 = vand.u32 2147483647, %v828
      %v869 = vand.u32 2147483647, %v829
      %v870 = vand.u32 2147483647, %v830
      %v871 = vand.u32 2147483647, %v831
      %v872 = vand.u32 2147483647, %v832
      %v873 = vand.u32 2147483647, %v833
      %v874 = vand.u32 2147483647, %v834
      %v875 = vmul.f32 %v867, 0.001
      %v876 = vmul.f32 %v868, 0.001
      %v877 = vmul.f32 %v869, 0.001
      %v878 = vmul.f32 %v870, 0.001
      %v879 = vmul.f32 %v871, 0.001
      %v880 = vmul.f32 %v872, 0.001
      %v881 = vmul.f32 %v873, 0.001
      %v882 = vmul.f32 %v874, 0.001
      %v883 = vadd.f32 %v827, %v875
      %v884 = vadd.f32 %v828, %v876
      %v885 = vadd.f32 %v829, %v877
      %v886 = vadd.f32 %v830, %v878
      %v887 = vadd.f32 %v831, %v879
      %v888 = vadd.f32 %v832, %v880
      %v889 = vadd.f32 %v833, %v881
      %v890 = vadd.f32 %v834, %v882
      %v891 = vmul.f32 %v883, %v225
      %v892 = vmul.f32 %v884, %v226
      %v893 = vmul.f32 %v885, %v227
      %v894 = vmul.f32 %v886, %v228
      %v895 = vmul.f32 %v887, %v229
      %v896 = vmul.f32 %v888, %v230
      %v897 = vmul.f32 %v889, %v231
      %v898 = vmul.f32 %v890, %v232
      %v907 = vrot.slane %v892, 7
      %v908 = vsel %vm563, %v907, %v891
      %v909 = vrot.slane %v893, 6
      %v910 = vsel %vm566, %v909, %v908
      %v911 = vrot.slane %v894, 5
      %v912 = vsel %vm569, %v911, %v910
      %v913 = vrot.slane %v895, 4
      %v914 = vsel %vm572, %v913, %v912
      %v915 = vrot.slane %v896, 3
      %v916 = vsel %vm575, %v915, %v914
      %v917 = vrot.slane %v897, 2
      %v918 = vsel %vm578, %v917, %v916
      %v919 = vrot.slane %v898, 1
      %vm922 = vcmask 31745
      %v923 = vsel %vm922, %v918, 0.0
      %924 = vadd.xlane.f32.xlu0 %v923
      %v925 = vpop.xlane.xlu0 %924
      %vm926 = vcmask 24576
      %v927 = vsel %vm926, %v919, 0.0
      %928 = vadd.xlane.f32.xlu0 %v927
      %v929 = vpop.xlane.xlu0 %928
      %vm932 = vcmask 1046528
      %v933 = vrot.slane %v925, 1
      %v934 = vrot.slane %v929, 1
      %v935 = vsel %vm932, %v933, %v934
      %v937 = vsub.f32 %v585, %v935
      %939 = vset.pattern.permute.xlu0 0
      %940 = vperm.xlu0 %939, %v859
      %v941 = vpop.permute.xlu0 %940
      %944 = vset.pattern.permute.xlu0 0
      %945 = vperm.xlu0 %944, %v860
      %v946 = vpop.permute.xlu0 %945
      %949 = vset.pattern.permute.xlu0 0
      %950 = vperm.xlu0 %949, %v861
      %v951 = vpop.permute.xlu0 %950
      %954 = vset.pattern.permute.xlu0 0
      %955 = vperm.xlu0 %954, %v862
      %v956 = vpop.permute.xlu0 %955
      %959 = vset.pattern.permute.xlu0 0
      %960 = vperm.xlu0 %959, %v863
      %v961 = vpop.permute.xlu0 %960
      %964 = vset.pattern.permute.xlu0 0
      %965 = vperm.xlu0 %964, %v864
      %v966 = vpop.permute.xlu0 %965
      %969 = vset.pattern.permute.xlu0 0
      %970 = vperm.xlu0 %969, %v865
      %v971 = vpop.permute.xlu0 %970
      %974 = vset.pattern.permute.xlu0 0
      %975 = vperm.xlu0 %974, %v866
      %v976 = vpop.permute.xlu0 %975
      %v978 = vmul.f32 %v941, %v468
      %v979 = vmul.f32 %v946, %v468
      %v980 = vmul.f32 %v951, %v468
      %v981 = vmul.f32 %v956, %v468
      %v982 = vmul.f32 %v961, %v468
      %v983 = vmul.f32 %v966, %v468
      %v984 = vmul.f32 %v971, %v468
      %v985 = vmul.f32 %v976, %v468
      %986 = vset.pattern.permute.xlu0 1
      %987 = vperm.xlu0 %986, %v859
      %v988 = vpop.permute.xlu0 %987
      %990 = vset.pattern.permute.xlu0 1
      %991 = vperm.xlu0 %990, %v860
      %v992 = vpop.permute.xlu0 %991
      %994 = vset.pattern.permute.xlu0 1
      %995 = vperm.xlu0 %994, %v861
      %v996 = vpop.permute.xlu0 %995
      %998 = vset.pattern.permute.xlu0 1
      %999 = vperm.xlu0 %998, %v862
      %v1000 = vpop.permute.xlu0 %999
      %1002 = vset.pattern.permute.xlu0 1
      %1003 = vperm.xlu0 %1002, %v863
      %v1004 = vpop.permute.xlu0 %1003
      %1006 = vset.pattern.permute.xlu0 1
      %1007 = vperm.xlu0 %1006, %v864
      %v1008 = vpop.permute.xlu0 %1007
      %1010 = vset.pattern.permute.xlu0 1
      %1011 = vperm.xlu0 %1010, %v865
      %v1012 = vpop.permute.xlu0 %1011
      %1014 = vset.pattern.permute.xlu0 1
      %1015 = vperm.xlu0 %1014, %v866
      %v1016 = vpop.permute.xlu0 %1015
      %v1018 = vmul.f32 %v988, %v473
      %v1019 = vmul.f32 %v992, %v473
      %v1020 = vmul.f32 %v996, %v473
      %v1021 = vmul.f32 %v1000, %v473
      %v1022 = vmul.f32 %v1004, %v473
      %v1023 = vmul.f32 %v1008, %v473
      %v1024 = vmul.f32 %v1012, %v473
      %v1025 = vmul.f32 %v1016, %v473
      %v1026 = vadd.f32 %v978, %v1018
      %v1027 = vadd.f32 %v979, %v1019
      %v1028 = vadd.f32 %v980, %v1020
      %v1029 = vadd.f32 %v981, %v1021
      %v1030 = vadd.f32 %v982, %v1022
      %v1031 = vadd.f32 %v983, %v1023
      %v1032 = vadd.f32 %v984, %v1024
      %v1033 = vadd.f32 %v985, %v1025
      %1034 = vset.pattern.permute.xlu0 2
      %1035 = vperm.xlu0 %1034, %v859
      %v1036 = vpop.permute.xlu0 %1035
      %1038 = vset.pattern.permute.xlu0 2
      %1039 = vperm.xlu0 %1038, %v860
      %v1040 = vpop.permute.xlu0 %1039
      %1042 = vset.pattern.permute.xlu0 2
      %1043 = vperm.xlu0 %1042, %v861
      %v1044 = vpop.permute.xlu0 %1043
      %1046 = vset.pattern.permute.xlu0 2
      %1047 = vperm.xlu0 %1046, %v862
      %v1048 = vpop.permute.xlu0 %1047
      %1050 = vset.pattern.permute.xlu0 2
      %1051 = vperm.xlu0 %1050, %v863
      %v1052 = vpop.permute.xlu0 %1051
      %1054 = vset.pattern.permute.xlu0 2
      %1055 = vperm.xlu0 %1054, %v864
      %v1056 = vpop.permute.xlu0 %1055
      %1058 = vset.pattern.permute.xlu0 2
      %1059 = vperm.xlu0 %1058, %v865
      %v1060 = vpop.permute.xlu0 %1059
      %1062 = vset.pattern.permute.xlu0 2
      %1063 = vperm.xlu0 %1062, %v866
      %v1064 = vpop.permute.xlu0 %1063
      %v1066 = vmul.f32 %v1036, %v479
      %v1067 = vmul.f32 %v1040, %v479
      %v1068 = vmul.f32 %v1044, %v479
      %v1069 = vmul.f32 %v1048, %v479
      %v1070 = vmul.f32 %v1052, %v479
      %v1071 = vmul.f32 %v1056, %v479
      %v1072 = vmul.f32 %v1060, %v479
      %v1073 = vmul.f32 %v1064, %v479
      %v1074 = vadd.f32 %v1026, %v1066
      %v1075 = vadd.f32 %v1027, %v1067
      %v1076 = vadd.f32 %v1028, %v1068
      %v1077 = vadd.f32 %v1029, %v1069
      %v1078 = vadd.f32 %v1030, %v1070
      %v1079 = vadd.f32 %v1031, %v1071
      %v1080 = vadd.f32 %v1032, %v1072
      %v1081 = vadd.f32 %v1033, %v1073
      %1082 = vset.pattern.permute.xlu0 3
      %1083 = vperm.xlu0 %1082, %v859
      %v1084 = vpop.permute.xlu0 %1083
      %1086 = vset.pattern.permute.xlu0 3
      %1087 = vperm.xlu0 %1086, %v860
      %v1088 = vpop.permute.xlu0 %1087
      %1090 = vset.pattern.permute.xlu0 3
      %1091 = vperm.xlu0 %1090, %v861
      %v1092 = vpop.permute.xlu0 %1091
      %1094 = vset.pattern.permute.xlu0 3
      %1095 = vperm.xlu0 %1094, %v862
      %v1096 = vpop.permute.xlu0 %1095
      %1098 = vset.pattern.permute.xlu0 3
      %1099 = vperm.xlu0 %1098, %v863
      %v1100 = vpop.permute.xlu0 %1099
      %1102 = vset.pattern.permute.xlu0 3
      %1103 = vperm.xlu0 %1102, %v864
      %v1104 = vpop.permute.xlu0 %1103
      %1106 = vset.pattern.permute.xlu0 3
      %1107 = vperm.xlu0 %1106, %v865
      %v1108 = vpop.permute.xlu0 %1107
      %1110 = vset.pattern.permute.xlu0 3
      %1111 = vperm.xlu0 %1110, %v866
      %v1112 = vpop.permute.xlu0 %1111
      %v1114 = vmul.f32 %v1084, %v485
      %v1115 = vmul.f32 %v1088, %v485
      %v1116 = vmul.f32 %v1092, %v485
      %v1117 = vmul.f32 %v1096, %v485
      %v1118 = vmul.f32 %v1100, %v485
      %v1119 = vmul.f32 %v1104, %v485
      %v1120 = vmul.f32 %v1108, %v485
      %v1121 = vmul.f32 %v1112, %v485
      %v1122 = vadd.f32 %v1074, %v1114
      %v1123 = vadd.f32 %v1075, %v1115
      %v1124 = vadd.f32 %v1076, %v1116
      %v1125 = vadd.f32 %v1077, %v1117
      %v1126 = vadd.f32 %v1078, %v1118
      %v1127 = vadd.f32 %v1079, %v1119
      %v1128 = vadd.f32 %v1080, %v1120
      %v1129 = vadd.f32 %v1081, %v1121
      %v1138 = vrot.slane %v1122, 6
      %v1139 = vrot.slane %v1123, 6
      %v1140 = vrot.slane %v1124, 6
      %v1141 = vrot.slane %v1125, 6
      %v1142 = vrot.slane %v1126, 6
      %v1143 = vrot.slane %v1127, 6
      %v1144 = vrot.slane %v1128, 6
      %v1145 = vrot.slane %v1129, 6
      %v1154 = vadd.f32 %v452, %v1138
      %v1155 = vadd.f32 %v453, %v1139
      %v1156 = vadd.f32 %v454, %v1140
      %v1157 = vadd.f32 %v455, %v1141
      %v1158 = vadd.f32 %v456, %v1142
      %v1159 = vadd.f32 %v457, %v1143
      %v1160 = vadd.f32 %v458, %v1144
      %v1161 = vadd.f32 %v459, %v1145
      %1163 = vset.pattern.permute.xlu0 0
      %1164 = vperm.xlu0 %1163, %v937
      %v1165 = vpop.permute.xlu0 %1164
      %v1167 = vmul.f32 %v1165, %v500
      %v1169 = vrot.slane %v1167, 6
      %v1170 = vrot.slane %v1167, 7
      %v1171 = vrot.slane %v1167, 1
      %v1172 = vrot.slane %v1167, 2
      %v1173 = vrot.slane %v1167, 3
      %v1174 = vrot.slane %v1167, 4
      %v1175 = vrot.slane %v1167, 5
      %v1184 = vadd.f32 %v1154, %v1169
      %v1185 = vadd.f32 %v1155, %v1170
      %v1186 = vadd.f32 %v1156, %v1167
      %v1187 = vadd.f32 %v1157, %v1171
      %v1188 = vadd.f32 %v1158, %v1172
      %v1189 = vadd.f32 %v1159, %v1173
      %v1190 = vadd.f32 %v1160, %v1174
      %v1191 = vadd.f32 %v1161, %v1175
      %v1200 = vrot.slane %v1184, 2
      %v1201 = vrot.slane %v1185, 2
      %v1202 = vrot.slane %v1186, 2
      %v1203 = vrot.slane %v1187, 2
      %v1204 = vrot.slane %v1188, 2
      %v1205 = vrot.slane %v1189, 2
      %v1206 = vrot.slane %v1190, 2
      %v1207 = vrot.slane %v1191, 2
      %v1216 = vadd.f32 %v859, %v1200
      %v1217 = vadd.f32 %v860, %v1201
      %v1218 = vadd.f32 %v861, %v1202
      %v1219 = vadd.f32 %v862, %v1203
      %v1220 = vadd.f32 %v863, %v1204
      %v1221 = vadd.f32 %v864, %v1205
      %v1222 = vadd.f32 %v865, %v1206
      %v1223 = vadd.f32 %v866, %v1207
      %v1224 = vand.u32 2147483647, %v1184
      %v1225 = vand.u32 2147483647, %v1185
      %v1226 = vand.u32 2147483647, %v1186
      %v1227 = vand.u32 2147483647, %v1187
      %v1228 = vand.u32 2147483647, %v1188
      %v1229 = vand.u32 2147483647, %v1189
      %v1230 = vand.u32 2147483647, %v1190
      %v1231 = vand.u32 2147483647, %v1191
      %v1232 = vmul.f32 %v1224, 0.001
      %v1233 = vmul.f32 %v1225, 0.001
      %v1234 = vmul.f32 %v1226, 0.001
      %v1235 = vmul.f32 %v1227, 0.001
      %v1236 = vmul.f32 %v1228, 0.001
      %v1237 = vmul.f32 %v1229, 0.001
      %v1238 = vmul.f32 %v1230, 0.001
      %v1239 = vmul.f32 %v1231, 0.001
      %v1240 = vadd.f32 %v1184, %v1232
      %v1241 = vadd.f32 %v1185, %v1233
      %v1242 = vadd.f32 %v1186, %v1234
      %v1243 = vadd.f32 %v1187, %v1235
      %v1244 = vadd.f32 %v1188, %v1236
      %v1245 = vadd.f32 %v1189, %v1237
      %v1246 = vadd.f32 %v1190, %v1238
      %v1247 = vadd.f32 %v1191, %v1239
      %v1248 = vmul.f32 %v1240, %v225
      %v1249 = vmul.f32 %v1241, %v226
      %v1250 = vmul.f32 %v1242, %v227
      %v1251 = vmul.f32 %v1243, %v228
      %v1252 = vmul.f32 %v1244, %v229
      %v1253 = vmul.f32 %v1245, %v230
      %v1254 = vmul.f32 %v1246, %v231
      %v1255 = vmul.f32 %v1247, %v232
      %v1264 = vrot.slane %v1249, 7
      %v1265 = vsel %vm566, %v1264, %v1248
      %v1266 = vrot.slane %v1250, 6
      %v1267 = vsel %vm569, %v1266, %v1265
      %v1268 = vrot.slane %v1251, 5
      %v1269 = vsel %vm572, %v1268, %v1267
      %v1270 = vrot.slane %v1252, 4
      %v1271 = vsel %vm575, %v1270, %v1269
      %v1272 = vrot.slane %v1253, 3
      %v1273 = vsel %vm578, %v1272, %v1271
      %v1274 = vrot.slane %v1254, 2
      %v1275 = vrot.slane %v1255, 1
      %v1276 = vsel %vm560, %v1275, %v1274
      %vm1279 = vcmask 31746
      %v1280 = vsel %vm1279, %v1273, 0.0
      %1281 = vadd.xlane.f32.xlu0 %v1280
      %v1282 = vpop.xlane.xlu0 %1281
      %vm1283 = vcmask 25600
      %v1284 = vsel %vm1283, %v1276, 0.0
      %1285 = vadd.xlane.f32.xlu0 %v1284
      %v1286 = vpop.xlane.xlu0 %1285
      %vm1289 = vcmask 1045504
      %v1290 = vrot.slane %v1282, 2
      %v1291 = vrot.slane %v1286, 2
      %v1292 = vsel %vm1289, %v1290, %v1291
      %v1294 = vsub.f32 %v937, %v1292
      %1296 = vset.pattern.permute.xlu0 0
      %1297 = vperm.xlu0 %1296, %v1216
      %v1298 = vpop.permute.xlu0 %1297
      %1301 = vset.pattern.permute.xlu0 0
      %1302 = vperm.xlu0 %1301, %v1217
      %v1303 = vpop.permute.xlu0 %1302
      %1306 = vset.pattern.permute.xlu0 0
      %1307 = vperm.xlu0 %1306, %v1218
      %v1308 = vpop.permute.xlu0 %1307
      %1311 = vset.pattern.permute.xlu0 0
      %1312 = vperm.xlu0 %1311, %v1219
      %v1313 = vpop.permute.xlu0 %1312
      %1316 = vset.pattern.permute.xlu0 0
      %1317 = vperm.xlu0 %1316, %v1220
      %v1318 = vpop.permute.xlu0 %1317
      %1321 = vset.pattern.permute.xlu0 0
      %1322 = vperm.xlu0 %1321, %v1221
      %v1323 = vpop.permute.xlu0 %1322
      %1326 = vset.pattern.permute.xlu0 0
      %1327 = vperm.xlu0 %1326, %v1222
      %v1328 = vpop.permute.xlu0 %1327
      %1331 = vset.pattern.permute.xlu0 0
      %1332 = vperm.xlu0 %1331, %v1223
      %v1333 = vpop.permute.xlu0 %1332
      %v1335 = vmul.f32 %v1298, %v468
      %v1336 = vmul.f32 %v1303, %v468
      %v1337 = vmul.f32 %v1308, %v468
      %v1338 = vmul.f32 %v1313, %v468
      %v1339 = vmul.f32 %v1318, %v468
      %v1340 = vmul.f32 %v1323, %v468
      %v1341 = vmul.f32 %v1328, %v468
      %v1342 = vmul.f32 %v1333, %v468
      %1343 = vset.pattern.permute.xlu0 1
      %1344 = vperm.xlu0 %1343, %v1216
      %v1345 = vpop.permute.xlu0 %1344
      %1347 = vset.pattern.permute.xlu0 1
      %1348 = vperm.xlu0 %1347, %v1217
      %v1349 = vpop.permute.xlu0 %1348
      %1351 = vset.pattern.permute.xlu0 1
      %1352 = vperm.xlu0 %1351, %v1218
      %v1353 = vpop.permute.xlu0 %1352
      %1355 = vset.pattern.permute.xlu0 1
      %1356 = vperm.xlu0 %1355, %v1219
      %v1357 = vpop.permute.xlu0 %1356
      %1359 = vset.pattern.permute.xlu0 1
      %1360 = vperm.xlu0 %1359, %v1220
      %v1361 = vpop.permute.xlu0 %1360
      %1363 = vset.pattern.permute.xlu0 1
      %1364 = vperm.xlu0 %1363, %v1221
      %v1365 = vpop.permute.xlu0 %1364
      %1367 = vset.pattern.permute.xlu0 1
      %1368 = vperm.xlu0 %1367, %v1222
      %v1369 = vpop.permute.xlu0 %1368
      %1371 = vset.pattern.permute.xlu0 1
      %1372 = vperm.xlu0 %1371, %v1223
      %v1373 = vpop.permute.xlu0 %1372
      %v1375 = vmul.f32 %v1345, %v473
      %v1376 = vmul.f32 %v1349, %v473
      %v1377 = vmul.f32 %v1353, %v473
      %v1378 = vmul.f32 %v1357, %v473
      %v1379 = vmul.f32 %v1361, %v473
      %v1380 = vmul.f32 %v1365, %v473
      %v1381 = vmul.f32 %v1369, %v473
      %v1382 = vmul.f32 %v1373, %v473
      %v1383 = vadd.f32 %v1335, %v1375
      %v1384 = vadd.f32 %v1336, %v1376
      %v1385 = vadd.f32 %v1337, %v1377
      %v1386 = vadd.f32 %v1338, %v1378
      %v1387 = vadd.f32 %v1339, %v1379
      %v1388 = vadd.f32 %v1340, %v1380
      %v1389 = vadd.f32 %v1341, %v1381
      %v1390 = vadd.f32 %v1342, %v1382
      %1391 = vset.pattern.permute.xlu0 2
      %1392 = vperm.xlu0 %1391, %v1216
      %v1393 = vpop.permute.xlu0 %1392
      %1395 = vset.pattern.permute.xlu0 2
      %1396 = vperm.xlu0 %1395, %v1217
      %v1397 = vpop.permute.xlu0 %1396
      %1399 = vset.pattern.permute.xlu0 2
      %1400 = vperm.xlu0 %1399, %v1218
      %v1401 = vpop.permute.xlu0 %1400
      %1403 = vset.pattern.permute.xlu0 2
      %1404 = vperm.xlu0 %1403, %v1219
      %v1405 = vpop.permute.xlu0 %1404
      %1407 = vset.pattern.permute.xlu0 2
      %1408 = vperm.xlu0 %1407, %v1220
      %v1409 = vpop.permute.xlu0 %1408
      %1411 = vset.pattern.permute.xlu0 2
      %1412 = vperm.xlu0 %1411, %v1221
      %v1413 = vpop.permute.xlu0 %1412
      %1415 = vset.pattern.permute.xlu0 2
      %1416 = vperm.xlu0 %1415, %v1222
      %v1417 = vpop.permute.xlu0 %1416
      %1419 = vset.pattern.permute.xlu0 2
      %1420 = vperm.xlu0 %1419, %v1223
      %v1421 = vpop.permute.xlu0 %1420
      %v1423 = vmul.f32 %v1393, %v479
      %v1424 = vmul.f32 %v1397, %v479
      %v1425 = vmul.f32 %v1401, %v479
      %v1426 = vmul.f32 %v1405, %v479
      %v1427 = vmul.f32 %v1409, %v479
      %v1428 = vmul.f32 %v1413, %v479
      %v1429 = vmul.f32 %v1417, %v479
      %v1430 = vmul.f32 %v1421, %v479
      %v1431 = vadd.f32 %v1383, %v1423
      %v1432 = vadd.f32 %v1384, %v1424
      %v1433 = vadd.f32 %v1385, %v1425
      %v1434 = vadd.f32 %v1386, %v1426
      %v1435 = vadd.f32 %v1387, %v1427
      %v1436 = vadd.f32 %v1388, %v1428
      %v1437 = vadd.f32 %v1389, %v1429
      %v1438 = vadd.f32 %v1390, %v1430
      %1439 = vset.pattern.permute.xlu0 3
      %1440 = vperm.xlu0 %1439, %v1216
      %v1441 = vpop.permute.xlu0 %1440
      %1443 = vset.pattern.permute.xlu0 3
      %1444 = vperm.xlu0 %1443, %v1217
      %v1445 = vpop.permute.xlu0 %1444
      %1447 = vset.pattern.permute.xlu0 3
      %1448 = vperm.xlu0 %1447, %v1218
      %v1449 = vpop.permute.xlu0 %1448
      %1451 = vset.pattern.permute.xlu0 3
      %1452 = vperm.xlu0 %1451, %v1219
      %v1453 = vpop.permute.xlu0 %1452
      %1455 = vset.pattern.permute.xlu0 3
      %1456 = vperm.xlu0 %1455, %v1220
      %v1457 = vpop.permute.xlu0 %1456
      %1459 = vset.pattern.permute.xlu0 3
      %1460 = vperm.xlu0 %1459, %v1221
      %v1461 = vpop.permute.xlu0 %1460
      %1463 = vset.pattern.permute.xlu0 3
      %1464 = vperm.xlu0 %1463, %v1222
      %v1465 = vpop.permute.xlu0 %1464
      %1467 = vset.pattern.permute.xlu0 3
      %1468 = vperm.xlu0 %1467, %v1223
      %v1469 = vpop.permute.xlu0 %1468
      %v1471 = vmul.f32 %v1441, %v485
      %v1472 = vmul.f32 %v1445, %v485
      %v1473 = vmul.f32 %v1449, %v485
      %v1474 = vmul.f32 %v1453, %v485
      %v1475 = vmul.f32 %v1457, %v485
      %v1476 = vmul.f32 %v1461, %v485
      %v1477 = vmul.f32 %v1465, %v485
      %v1478 = vmul.f32 %v1469, %v485
      %v1479 = vadd.f32 %v1431, %v1471
      %v1480 = vadd.f32 %v1432, %v1472
      %v1481 = vadd.f32 %v1433, %v1473
      %v1482 = vadd.f32 %v1434, %v1474
      %v1483 = vadd.f32 %v1435, %v1475
      %v1484 = vadd.f32 %v1436, %v1476
      %v1485 = vadd.f32 %v1437, %v1477
      %v1486 = vadd.f32 %v1438, %v1478
      %v1495 = vrot.slane %v1479, 5
      %v1496 = vrot.slane %v1480, 5
      %v1497 = vrot.slane %v1481, 5
      %v1498 = vrot.slane %v1482, 5
      %v1499 = vrot.slane %v1483, 5
      %v1500 = vrot.slane %v1484, 5
      %v1501 = vrot.slane %v1485, 5
      %v1502 = vrot.slane %v1486, 5
      %v1511 = vadd.f32 %v452, %v1495
      %v1512 = vadd.f32 %v453, %v1496
      %v1513 = vadd.f32 %v454, %v1497
      %v1514 = vadd.f32 %v455, %v1498
      %v1515 = vadd.f32 %v456, %v1499
      %v1516 = vadd.f32 %v457, %v1500
      %v1517 = vadd.f32 %v458, %v1501
      %v1518 = vadd.f32 %v459, %v1502
      %1520 = vset.pattern.permute.xlu0 0
      %1521 = vperm.xlu0 %1520, %v1294
      %v1522 = vpop.permute.xlu0 %1521
      %v1524 = vmul.f32 %v1522, %v500
      %v1526 = vrot.slane %v1524, 5
      %v1527 = vrot.slane %v1524, 6
      %v1528 = vrot.slane %v1524, 7
      %v1529 = vrot.slane %v1524, 1
      %v1530 = vrot.slane %v1524, 2
      %v1531 = vrot.slane %v1524, 3
      %v1532 = vrot.slane %v1524, 4
      %v1541 = vadd.f32 %v1511, %v1526
      %v1542 = vadd.f32 %v1512, %v1527
      %v1543 = vadd.f32 %v1513, %v1528
      %v1544 = vadd.f32 %v1514, %v1524
      %v1545 = vadd.f32 %v1515, %v1529
      %v1546 = vadd.f32 %v1516, %v1530
      %v1547 = vadd.f32 %v1517, %v1531
      %v1548 = vadd.f32 %v1518, %v1532
      %v1557 = vrot.slane %v1541, 3
      %v1558 = vrot.slane %v1542, 3
      %v1559 = vrot.slane %v1543, 3
      %v1560 = vrot.slane %v1544, 3
      %v1561 = vrot.slane %v1545, 3
      %v1562 = vrot.slane %v1546, 3
      %v1563 = vrot.slane %v1547, 3
      %v1564 = vrot.slane %v1548, 3
      %v1573 = vadd.f32 %v1216, %v1557
      %v1574 = vadd.f32 %v1217, %v1558
      %v1575 = vadd.f32 %v1218, %v1559
      %v1576 = vadd.f32 %v1219, %v1560
      %v1577 = vadd.f32 %v1220, %v1561
      %v1578 = vadd.f32 %v1221, %v1562
      %v1579 = vadd.f32 %v1222, %v1563
      %v1580 = vadd.f32 %v1223, %v1564
      %v1581 = vand.u32 2147483647, %v1541
      %v1582 = vand.u32 2147483647, %v1542
      %v1583 = vand.u32 2147483647, %v1543
      %v1584 = vand.u32 2147483647, %v1544
      %v1585 = vand.u32 2147483647, %v1545
      %v1586 = vand.u32 2147483647, %v1546
      %v1587 = vand.u32 2147483647, %v1547
      %v1588 = vand.u32 2147483647, %v1548
      %v1589 = vmul.f32 %v1581, 0.001
      %v1590 = vmul.f32 %v1582, 0.001
      %v1591 = vmul.f32 %v1583, 0.001
      %v1592 = vmul.f32 %v1584, 0.001
      %v1593 = vmul.f32 %v1585, 0.001
      %v1594 = vmul.f32 %v1586, 0.001
      %v1595 = vmul.f32 %v1587, 0.001
      %v1596 = vmul.f32 %v1588, 0.001
      %v1597 = vadd.f32 %v1541, %v1589
      %v1598 = vadd.f32 %v1542, %v1590
      %v1599 = vadd.f32 %v1543, %v1591
      %v1600 = vadd.f32 %v1544, %v1592
      %v1601 = vadd.f32 %v1545, %v1593
      %v1602 = vadd.f32 %v1546, %v1594
      %v1603 = vadd.f32 %v1547, %v1595
      %v1604 = vadd.f32 %v1548, %v1596
      %v1605 = vmul.f32 %v1597, %v225
      %v1606 = vmul.f32 %v1598, %v226
      %v1607 = vmul.f32 %v1599, %v227
      %v1608 = vmul.f32 %v1600, %v228
      %v1609 = vmul.f32 %v1601, %v229
      %v1610 = vmul.f32 %v1602, %v230
      %v1611 = vmul.f32 %v1603, %v231
      %v1612 = vmul.f32 %v1604, %v232
      %v1621 = vrot.slane %v1606, 7
      %v1622 = vsel %vm569, %v1621, %v1605
      %v1623 = vrot.slane %v1607, 6
      %v1624 = vsel %vm572, %v1623, %v1622
      %v1625 = vrot.slane %v1608, 5
      %v1626 = vsel %vm575, %v1625, %v1624
      %v1627 = vrot.slane %v1609, 4
      %v1628 = vsel %vm578, %v1627, %v1626
      %v1629 = vrot.slane %v1610, 3
      %v1630 = vrot.slane %v1611, 2
      %v1631 = vsel %vm560, %v1630, %v1629
      %v1632 = vrot.slane %v1612, 1
      %v1633 = vsel %vm563, %v1632, %v1631
      %vm1636 = vcmask 31747
      %v1637 = vsel %vm1636, %v1628, 0.0
      %1638 = vadd.xlane.f32.xlu0 %v1637
      %v1639 = vpop.xlane.xlu0 %1638
      %vm1640 = vcmask 26624
      %v1641 = vsel %vm1640, %v1633, 0.0
      %1642 = vadd.xlane.f32.xlu0 %v1641
      %v1643 = vpop.xlane.xlu0 %1642
      %vm1646 = vcmask 1044480
      %v1647 = vrot.slane %v1639, 3
      %v1648 = vrot.slane %v1643, 3
      %v1649 = vsel %vm1646, %v1647, %v1648
      %v1651 = vsub.f32 %v1294, %v1649
      %1653 = vset.pattern.permute.xlu0 0
      %1654 = vperm.xlu0 %1653, %v1573
      %v1655 = vpop.permute.xlu0 %1654
      %1658 = vset.pattern.permute.xlu0 0
      %1659 = vperm.xlu0 %1658, %v1574
      %v1660 = vpop.permute.xlu0 %1659
      %1663 = vset.pattern.permute.xlu0 0
      %1664 = vperm.xlu0 %1663, %v1575
      %v1665 = vpop.permute.xlu0 %1664
      %1668 = vset.pattern.permute.xlu0 0
      %1669 = vperm.xlu0 %1668, %v1576
      %v1670 = vpop.permute.xlu0 %1669
      %1673 = vset.pattern.permute.xlu0 0
      %1674 = vperm.xlu0 %1673, %v1577
      %v1675 = vpop.permute.xlu0 %1674
      %1678 = vset.pattern.permute.xlu0 0
      %1679 = vperm.xlu0 %1678, %v1578
      %v1680 = vpop.permute.xlu0 %1679
      %1683 = vset.pattern.permute.xlu0 0
      %1684 = vperm.xlu0 %1683, %v1579
      %v1685 = vpop.permute.xlu0 %1684
      %1688 = vset.pattern.permute.xlu0 0
      %1689 = vperm.xlu0 %1688, %v1580
      %v1690 = vpop.permute.xlu0 %1689
      %v1692 = vmul.f32 %v1655, %v468
      %v1693 = vmul.f32 %v1660, %v468
      %v1694 = vmul.f32 %v1665, %v468
      %v1695 = vmul.f32 %v1670, %v468
      %v1696 = vmul.f32 %v1675, %v468
      %v1697 = vmul.f32 %v1680, %v468
      %v1698 = vmul.f32 %v1685, %v468
      %v1699 = vmul.f32 %v1690, %v468
      %1700 = vset.pattern.permute.xlu0 1
      %1701 = vperm.xlu0 %1700, %v1573
      %v1702 = vpop.permute.xlu0 %1701
      %1704 = vset.pattern.permute.xlu0 1
      %1705 = vperm.xlu0 %1704, %v1574
      %v1706 = vpop.permute.xlu0 %1705
      %1708 = vset.pattern.permute.xlu0 1
      %1709 = vperm.xlu0 %1708, %v1575
      %v1710 = vpop.permute.xlu0 %1709
      %1712 = vset.pattern.permute.xlu0 1
      %1713 = vperm.xlu0 %1712, %v1576
      %v1714 = vpop.permute.xlu0 %1713
      %1716 = vset.pattern.permute.xlu0 1
      %1717 = vperm.xlu0 %1716, %v1577
      %v1718 = vpop.permute.xlu0 %1717
      %1720 = vset.pattern.permute.xlu0 1
      %1721 = vperm.xlu0 %1720, %v1578
      %v1722 = vpop.permute.xlu0 %1721
      %1724 = vset.pattern.permute.xlu0 1
      %1725 = vperm.xlu0 %1724, %v1579
      %v1726 = vpop.permute.xlu0 %1725
      %1728 = vset.pattern.permute.xlu0 1
      %1729 = vperm.xlu0 %1728, %v1580
      %v1730 = vpop.permute.xlu0 %1729
      %v1732 = vmul.f32 %v1702, %v473
      %v1733 = vmul.f32 %v1706, %v473
      %v1734 = vmul.f32 %v1710, %v473
      %v1735 = vmul.f32 %v1714, %v473
      %v1736 = vmul.f32 %v1718, %v473
      %v1737 = vmul.f32 %v1722, %v473
      %v1738 = vmul.f32 %v1726, %v473
      %v1739 = vmul.f32 %v1730, %v473
      %v1740 = vadd.f32 %v1692, %v1732
      %v1741 = vadd.f32 %v1693, %v1733
      %v1742 = vadd.f32 %v1694, %v1734
      %v1743 = vadd.f32 %v1695, %v1735
      %v1744 = vadd.f32 %v1696, %v1736
      %v1745 = vadd.f32 %v1697, %v1737
      %v1746 = vadd.f32 %v1698, %v1738
      %v1747 = vadd.f32 %v1699, %v1739
      %1748 = vset.pattern.permute.xlu0 2
      %1749 = vperm.xlu0 %1748, %v1573
      %v1750 = vpop.permute.xlu0 %1749
      %1752 = vset.pattern.permute.xlu0 2
      %1753 = vperm.xlu0 %1752, %v1574
      %v1754 = vpop.permute.xlu0 %1753
      %1756 = vset.pattern.permute.xlu0 2
      %1757 = vperm.xlu0 %1756, %v1575
      %v1758 = vpop.permute.xlu0 %1757
      %1760 = vset.pattern.permute.xlu0 2
      %1761 = vperm.xlu0 %1760, %v1576
      %v1762 = vpop.permute.xlu0 %1761
      %1764 = vset.pattern.permute.xlu0 2
      %1765 = vperm.xlu0 %1764, %v1577
      %v1766 = vpop.permute.xlu0 %1765
      %1768 = vset.pattern.permute.xlu0 2
      %1769 = vperm.xlu0 %1768, %v1578
      %v1770 = vpop.permute.xlu0 %1769
      %1772 = vset.pattern.permute.xlu0 2
      %1773 = vperm.xlu0 %1772, %v1579
      %v1774 = vpop.permute.xlu0 %1773
      %1776 = vset.pattern.permute.xlu0 2
      %1777 = vperm.xlu0 %1776, %v1580
      %v1778 = vpop.permute.xlu0 %1777
      %v1780 = vmul.f32 %v1750, %v479
      %v1781 = vmul.f32 %v1754, %v479
      %v1782 = vmul.f32 %v1758, %v479
      %v1783 = vmul.f32 %v1762, %v479
      %v1784 = vmul.f32 %v1766, %v479
      %v1785 = vmul.f32 %v1770, %v479
      %v1786 = vmul.f32 %v1774, %v479
      %v1787 = vmul.f32 %v1778, %v479
      %v1788 = vadd.f32 %v1740, %v1780
      %v1789 = vadd.f32 %v1741, %v1781
      %v1790 = vadd.f32 %v1742, %v1782
      %v1791 = vadd.f32 %v1743, %v1783
      %v1792 = vadd.f32 %v1744, %v1784
      %v1793 = vadd.f32 %v1745, %v1785
      %v1794 = vadd.f32 %v1746, %v1786
      %v1795 = vadd.f32 %v1747, %v1787
      %1796 = vset.pattern.permute.xlu0 3
      %1797 = vperm.xlu0 %1796, %v1573
      %v1798 = vpop.permute.xlu0 %1797
      %1800 = vset.pattern.permute.xlu0 3
      %1801 = vperm.xlu0 %1800, %v1574
      %v1802 = vpop.permute.xlu0 %1801
      %1804 = vset.pattern.permute.xlu0 3
      %1805 = vperm.xlu0 %1804, %v1575
      %v1806 = vpop.permute.xlu0 %1805
      %1808 = vset.pattern.permute.xlu0 3
      %1809 = vperm.xlu0 %1808, %v1576
      %v1810 = vpop.permute.xlu0 %1809
      %1812 = vset.pattern.permute.xlu0 3
      %1813 = vperm.xlu0 %1812, %v1577
      %v1814 = vpop.permute.xlu0 %1813
      %1816 = vset.pattern.permute.xlu0 3
      %1817 = vperm.xlu0 %1816, %v1578
      %v1818 = vpop.permute.xlu0 %1817
      %1820 = vset.pattern.permute.xlu0 3
      %1821 = vperm.xlu0 %1820, %v1579
      %v1822 = vpop.permute.xlu0 %1821
      %1824 = vset.pattern.permute.xlu0 3
      %1825 = vperm.xlu0 %1824, %v1580
      %v1826 = vpop.permute.xlu0 %1825
      %v1828 = vmul.f32 %v1798, %v485
      %v1829 = vmul.f32 %v1802, %v485
      %v1830 = vmul.f32 %v1806, %v485
      %v1831 = vmul.f32 %v1810, %v485
      %v1832 = vmul.f32 %v1814, %v485
      %v1833 = vmul.f32 %v1818, %v485
      %v1834 = vmul.f32 %v1822, %v485
      %v1835 = vmul.f32 %v1826, %v485
      %v1836 = vadd.f32 %v1788, %v1828
      %v1837 = vadd.f32 %v1789, %v1829
      %v1838 = vadd.f32 %v1790, %v1830
      %v1839 = vadd.f32 %v1791, %v1831
      %v1840 = vadd.f32 %v1792, %v1832
      %v1841 = vadd.f32 %v1793, %v1833
      %v1842 = vadd.f32 %v1794, %v1834
      %v1843 = vadd.f32 %v1795, %v1835
      %v1852 = vrot.slane %v1836, 4
      %v1853 = vrot.slane %v1837, 4
      %v1854 = vrot.slane %v1838, 4
      %v1855 = vrot.slane %v1839, 4
      %v1856 = vrot.slane %v1840, 4
      %v1857 = vrot.slane %v1841, 4
      %v1858 = vrot.slane %v1842, 4
      %v1859 = vrot.slane %v1843, 4
      %v1868 = vadd.f32 %v452, %v1852
      %v1869 = vadd.f32 %v453, %v1853
      %v1870 = vadd.f32 %v454, %v1854
      %v1871 = vadd.f32 %v455, %v1855
      %v1872 = vadd.f32 %v456, %v1856
      %v1873 = vadd.f32 %v457, %v1857
      %v1874 = vadd.f32 %v458, %v1858
      %v1875 = vadd.f32 %v459, %v1859
      %1877 = vset.pattern.permute.xlu0 0
      %1878 = vperm.xlu0 %1877, %v1651
      %v1879 = vpop.permute.xlu0 %1878
      %v1881 = vmul.f32 %v1879, %v500
      %v1883 = vrot.slane %v1881, 4
      %v1884 = vrot.slane %v1881, 5
      %v1885 = vrot.slane %v1881, 6
      %v1886 = vrot.slane %v1881, 7
      %v1887 = vrot.slane %v1881, 1
      %v1888 = vrot.slane %v1881, 2
      %v1889 = vrot.slane %v1881, 3
      %v1898 = vadd.f32 %v1868, %v1883
      %v1899 = vadd.f32 %v1869, %v1884
      %v1900 = vadd.f32 %v1870, %v1885
      %v1901 = vadd.f32 %v1871, %v1886
      %v1902 = vadd.f32 %v1872, %v1881
      %v1903 = vadd.f32 %v1873, %v1887
      %v1904 = vadd.f32 %v1874, %v1888
      %v1905 = vadd.f32 %v1875, %v1889
      %v1914 = vrot.slane %v1898, 4
      %v1915 = vrot.slane %v1899, 4
      %v1916 = vrot.slane %v1900, 4
      %v1917 = vrot.slane %v1901, 4
      %v1918 = vrot.slane %v1902, 4
      %v1919 = vrot.slane %v1903, 4
      %v1920 = vrot.slane %v1904, 4
      %v1921 = vrot.slane %v1905, 4
      %v1930 = vadd.f32 %v1573, %v1914
      %v1931 = vadd.f32 %v1574, %v1915
      %v1932 = vadd.f32 %v1575, %v1916
      %v1933 = vadd.f32 %v1576, %v1917
      %v1934 = vadd.f32 %v1577, %v1918
      %v1935 = vadd.f32 %v1578, %v1919
      %v1936 = vadd.f32 %v1579, %v1920
      %v1937 = vadd.f32 %v1580, %v1921
      %v1938 = vand.u32 2147483647, %v1898
      %v1939 = vand.u32 2147483647, %v1899
      %v1940 = vand.u32 2147483647, %v1900
      %v1941 = vand.u32 2147483647, %v1901
      %v1942 = vand.u32 2147483647, %v1902
      %v1943 = vand.u32 2147483647, %v1903
      %v1944 = vand.u32 2147483647, %v1904
      %v1945 = vand.u32 2147483647, %v1905
      %v1946 = vmul.f32 %v1938, 0.001
      %v1947 = vmul.f32 %v1939, 0.001
      %v1948 = vmul.f32 %v1940, 0.001
      %v1949 = vmul.f32 %v1941, 0.001
      %v1950 = vmul.f32 %v1942, 0.001
      %v1951 = vmul.f32 %v1943, 0.001
      %v1952 = vmul.f32 %v1944, 0.001
      %v1953 = vmul.f32 %v1945, 0.001
      %v1954 = vadd.f32 %v1898, %v1946
      %v1955 = vadd.f32 %v1899, %v1947
      %v1956 = vadd.f32 %v1900, %v1948
      %v1957 = vadd.f32 %v1901, %v1949
      %v1958 = vadd.f32 %v1902, %v1950
      %v1959 = vadd.f32 %v1903, %v1951
      %v1960 = vadd.f32 %v1904, %v1952
      %v1961 = vadd.f32 %v1905, %v1953
      %v1962 = vmul.f32 %v1954, %v225
      %v1963 = vmul.f32 %v1955, %v226
      %v1964 = vmul.f32 %v1956, %v227
      %v1965 = vmul.f32 %v1957, %v228
      %v1966 = vmul.f32 %v1958, %v229
      %v1967 = vmul.f32 %v1959, %v230
      %v1968 = vmul.f32 %v1960, %v231
      %v1969 = vmul.f32 %v1961, %v232
      %v1978 = vrot.slane %v1963, 7
      %v1979 = vsel %vm572, %v1978, %v1962
      %v1980 = vrot.slane %v1964, 6
      %v1981 = vsel %vm575, %v1980, %v1979
      %v1982 = vrot.slane %v1965, 5
      %v1983 = vsel %vm578, %v1982, %v1981
      %v1984 = vrot.slane %v1966, 4
      %v1985 = vrot.slane %v1967, 3
      %v1986 = vsel %vm560, %v1985, %v1984
      %v1987 = vrot.slane %v1968, 2
      %v1988 = vsel %vm563, %v1987, %v1986
      %v1989 = vrot.slane %v1969, 1
      %v1990 = vsel %vm566, %v1989, %v1988
      %vm1993 = vcmask 31748
      %v1994 = vsel %vm1993, %v1983, 0.0
      %1995 = vadd.xlane.f32.xlu0 %v1994
      %v1996 = vpop.xlane.xlu0 %1995
      %vm1997 = vcmask 27648
      %v1998 = vsel %vm1997, %v1990, 0.0
      %1999 = vadd.xlane.f32.xlu0 %v1998
      %v2000 = vpop.xlane.xlu0 %1999
      %vm2003 = vcmask 1043456
      %v2004 = vrot.slane %v1996, 4
      %v2005 = vrot.slane %v2000, 4
      %v2006 = vsel %vm2003, %v2004, %v2005
      %v2008 = vsub.f32 %v1651, %v2006
      %2010 = vset.pattern.permute.xlu0 0
      %2011 = vperm.xlu0 %2010, %v1930
      %v2012 = vpop.permute.xlu0 %2011
      %2015 = vset.pattern.permute.xlu0 0
      %2016 = vperm.xlu0 %2015, %v1931
      %v2017 = vpop.permute.xlu0 %2016
      %2020 = vset.pattern.permute.xlu0 0
      %2021 = vperm.xlu0 %2020, %v1932
      %v2022 = vpop.permute.xlu0 %2021
      %2025 = vset.pattern.permute.xlu0 0
      %2026 = vperm.xlu0 %2025, %v1933
      %v2027 = vpop.permute.xlu0 %2026
      %2030 = vset.pattern.permute.xlu0 0
      %2031 = vperm.xlu0 %2030, %v1934
      %v2032 = vpop.permute.xlu0 %2031
      %2035 = vset.pattern.permute.xlu0 0
      %2036 = vperm.xlu0 %2035, %v1935
      %v2037 = vpop.permute.xlu0 %2036
      %2040 = vset.pattern.permute.xlu0 0
      %2041 = vperm.xlu0 %2040, %v1936
      %v2042 = vpop.permute.xlu0 %2041
      %2045 = vset.pattern.permute.xlu0 0
      %2046 = vperm.xlu0 %2045, %v1937
      %v2047 = vpop.permute.xlu0 %2046
      %v2049 = vmul.f32 %v2012, %v468
      %v2050 = vmul.f32 %v2017, %v468
      %v2051 = vmul.f32 %v2022, %v468
      %v2052 = vmul.f32 %v2027, %v468
      %v2053 = vmul.f32 %v2032, %v468
      %v2054 = vmul.f32 %v2037, %v468
      %v2055 = vmul.f32 %v2042, %v468
      %v2056 = vmul.f32 %v2047, %v468
      %2057 = vset.pattern.permute.xlu0 1
      %2058 = vperm.xlu0 %2057, %v1930
      %v2059 = vpop.permute.xlu0 %2058
      %2061 = vset.pattern.permute.xlu0 1
      %2062 = vperm.xlu0 %2061, %v1931
      %v2063 = vpop.permute.xlu0 %2062
      %2065 = vset.pattern.permute.xlu0 1
      %2066 = vperm.xlu0 %2065, %v1932
      %v2067 = vpop.permute.xlu0 %2066
      %2069 = vset.pattern.permute.xlu0 1
      %2070 = vperm.xlu0 %2069, %v1933
      %v2071 = vpop.permute.xlu0 %2070
      %2073 = vset.pattern.permute.xlu0 1
      %2074 = vperm.xlu0 %2073, %v1934
      %v2075 = vpop.permute.xlu0 %2074
      %2077 = vset.pattern.permute.xlu0 1
      %2078 = vperm.xlu0 %2077, %v1935
      %v2079 = vpop.permute.xlu0 %2078
      %2081 = vset.pattern.permute.xlu0 1
      %2082 = vperm.xlu0 %2081, %v1936
      %v2083 = vpop.permute.xlu0 %2082
      %2085 = vset.pattern.permute.xlu0 1
      %2086 = vperm.xlu0 %2085, %v1937
      %v2087 = vpop.permute.xlu0 %2086
      %v2089 = vmul.f32 %v2059, %v473
      %v2090 = vmul.f32 %v2063, %v473
      %v2091 = vmul.f32 %v2067, %v473
      %v2092 = vmul.f32 %v2071, %v473
      %v2093 = vmul.f32 %v2075, %v473
      %v2094 = vmul.f32 %v2079, %v473
      %v2095 = vmul.f32 %v2083, %v473
      %v2096 = vmul.f32 %v2087, %v473
      %v2097 = vadd.f32 %v2049, %v2089
      %v2098 = vadd.f32 %v2050, %v2090
      %v2099 = vadd.f32 %v2051, %v2091
      %v2100 = vadd.f32 %v2052, %v2092
      %v2101 = vadd.f32 %v2053, %v2093
      %v2102 = vadd.f32 %v2054, %v2094
      %v2103 = vadd.f32 %v2055, %v2095
      %v2104 = vadd.f32 %v2056, %v2096
      %2105 = vset.pattern.permute.xlu0 2
      %2106 = vperm.xlu0 %2105, %v1930
      %v2107 = vpop.permute.xlu0 %2106
      %2109 = vset.pattern.permute.xlu0 2
      %2110 = vperm.xlu0 %2109, %v1931
      %v2111 = vpop.permute.xlu0 %2110
      %2113 = vset.pattern.permute.xlu0 2
      %2114 = vperm.xlu0 %2113, %v1932
      %v2115 = vpop.permute.xlu0 %2114
      %2117 = vset.pattern.permute.xlu0 2
      %2118 = vperm.xlu0 %2117, %v1933
      %v2119 = vpop.permute.xlu0 %2118
      %2121 = vset.pattern.permute.xlu0 2
      %2122 = vperm.xlu0 %2121, %v1934
      %v2123 = vpop.permute.xlu0 %2122
      %2125 = vset.pattern.permute.xlu0 2
      %2126 = vperm.xlu0 %2125, %v1935
      %v2127 = vpop.permute.xlu0 %2126
      %2129 = vset.pattern.permute.xlu0 2
      %2130 = vperm.xlu0 %2129, %v1936
      %v2131 = vpop.permute.xlu0 %2130
      %2133 = vset.pattern.permute.xlu0 2
      %2134 = vperm.xlu0 %2133, %v1937
      %v2135 = vpop.permute.xlu0 %2134
      %v2137 = vmul.f32 %v2107, %v479
      %v2138 = vmul.f32 %v2111, %v479
      %v2139 = vmul.f32 %v2115, %v479
      %v2140 = vmul.f32 %v2119, %v479
      %v2141 = vmul.f32 %v2123, %v479
      %v2142 = vmul.f32 %v2127, %v479
      %v2143 = vmul.f32 %v2131, %v479
      %v2144 = vmul.f32 %v2135, %v479
      %v2145 = vadd.f32 %v2097, %v2137
      %v2146 = vadd.f32 %v2098, %v2138
      %v2147 = vadd.f32 %v2099, %v2139
      %v2148 = vadd.f32 %v2100, %v2140
      %v2149 = vadd.f32 %v2101, %v2141
      %v2150 = vadd.f32 %v2102, %v2142
      %v2151 = vadd.f32 %v2103, %v2143
      %v2152 = vadd.f32 %v2104, %v2144
      %2153 = vset.pattern.permute.xlu0 3
      %2154 = vperm.xlu0 %2153, %v1930
      %v2155 = vpop.permute.xlu0 %2154
      %2157 = vset.pattern.permute.xlu0 3
      %2158 = vperm.xlu0 %2157, %v1931
      %v2159 = vpop.permute.xlu0 %2158
      %2161 = vset.pattern.permute.xlu0 3
      %2162 = vperm.xlu0 %2161, %v1932
      %v2163 = vpop.permute.xlu0 %2162
      %2165 = vset.pattern.permute.xlu0 3
      %2166 = vperm.xlu0 %2165, %v1933
      %v2167 = vpop.permute.xlu0 %2166
      %2169 = vset.pattern.permute.xlu0 3
      %2170 = vperm.xlu0 %2169, %v1934
      %v2171 = vpop.permute.xlu0 %2170
      %2173 = vset.pattern.permute.xlu0 3
      %2174 = vperm.xlu0 %2173, %v1935
      %v2175 = vpop.permute.xlu0 %2174
      %2177 = vset.pattern.permute.xlu0 3
      %2178 = vperm.xlu0 %2177, %v1936
      %v2179 = vpop.permute.xlu0 %2178
      %2181 = vset.pattern.permute.xlu0 3
      %2182 = vperm.xlu0 %2181, %v1937
      %v2183 = vpop.permute.xlu0 %2182
      %v2185 = vmul.f32 %v2155, %v485
      %v2186 = vmul.f32 %v2159, %v485
      %v2187 = vmul.f32 %v2163, %v485
      %v2188 = vmul.f32 %v2167, %v485
      %v2189 = vmul.f32 %v2171, %v485
      %v2190 = vmul.f32 %v2175, %v485
      %v2191 = vmul.f32 %v2179, %v485
      %v2192 = vmul.f32 %v2183, %v485
      %v2193 = vadd.f32 %v2145, %v2185
      %v2194 = vadd.f32 %v2146, %v2186
      %v2195 = vadd.f32 %v2147, %v2187
      %v2196 = vadd.f32 %v2148, %v2188
      %v2197 = vadd.f32 %v2149, %v2189
      %v2198 = vadd.f32 %v2150, %v2190
      %v2199 = vadd.f32 %v2151, %v2191
      %v2200 = vadd.f32 %v2152, %v2192
      %v2209 = vrot.slane %v2193, 3
      %v2210 = vrot.slane %v2194, 3
      %v2211 = vrot.slane %v2195, 3
      %v2212 = vrot.slane %v2196, 3
      %v2213 = vrot.slane %v2197, 3
      %v2214 = vrot.slane %v2198, 3
      %v2215 = vrot.slane %v2199, 3
      %v2216 = vrot.slane %v2200, 3
      %v2225 = vadd.f32 %v452, %v2209
      %v2226 = vadd.f32 %v453, %v2210
      %v2227 = vadd.f32 %v454, %v2211
      %v2228 = vadd.f32 %v455, %v2212
      %v2229 = vadd.f32 %v456, %v2213
      %v2230 = vadd.f32 %v457, %v2214
      %v2231 = vadd.f32 %v458, %v2215
      %v2232 = vadd.f32 %v459, %v2216
      %2234 = vset.pattern.permute.xlu0 0
      %2235 = vperm.xlu0 %2234, %v2008
      %v2236 = vpop.permute.xlu0 %2235
      %v2238 = vmul.f32 %v2236, %v500
      %v2240 = vrot.slane %v2238, 3
      %v2241 = vrot.slane %v2238, 4
      %v2242 = vrot.slane %v2238, 5
      %v2243 = vrot.slane %v2238, 6
      %v2244 = vrot.slane %v2238, 7
      %v2245 = vrot.slane %v2238, 1
      %v2246 = vrot.slane %v2238, 2
      %v2255 = vadd.f32 %v2225, %v2240
      %v2256 = vadd.f32 %v2226, %v2241
      %v2257 = vadd.f32 %v2227, %v2242
      %v2258 = vadd.f32 %v2228, %v2243
      %v2259 = vadd.f32 %v2229, %v2244
      %v2260 = vadd.f32 %v2230, %v2238
      %v2261 = vadd.f32 %v2231, %v2245
      %v2262 = vadd.f32 %v2232, %v2246
      %v2271 = vrot.slane %v2255, 5
      %v2272 = vrot.slane %v2256, 5
      %v2273 = vrot.slane %v2257, 5
      %v2274 = vrot.slane %v2258, 5
      %v2275 = vrot.slane %v2259, 5
      %v2276 = vrot.slane %v2260, 5
      %v2277 = vrot.slane %v2261, 5
      %v2278 = vrot.slane %v2262, 5
      %v2287 = vadd.f32 %v1930, %v2271
      %v2288 = vadd.f32 %v1931, %v2272
      %v2289 = vadd.f32 %v1932, %v2273
      %v2290 = vadd.f32 %v1933, %v2274
      %v2291 = vadd.f32 %v1934, %v2275
      %v2292 = vadd.f32 %v1935, %v2276
      %v2293 = vadd.f32 %v1936, %v2277
      %v2294 = vadd.f32 %v1937, %v2278
      %v2295 = vand.u32 2147483647, %v2255
      %v2296 = vand.u32 2147483647, %v2256
      %v2297 = vand.u32 2147483647, %v2257
      %v2298 = vand.u32 2147483647, %v2258
      %v2299 = vand.u32 2147483647, %v2259
      %v2300 = vand.u32 2147483647, %v2260
      %v2301 = vand.u32 2147483647, %v2261
      %v2302 = vand.u32 2147483647, %v2262
      %v2303 = vmul.f32 %v2295, 0.001
      %v2304 = vmul.f32 %v2296, 0.001
      %v2305 = vmul.f32 %v2297, 0.001
      %v2306 = vmul.f32 %v2298, 0.001
      %v2307 = vmul.f32 %v2299, 0.001
      %v2308 = vmul.f32 %v2300, 0.001
      %v2309 = vmul.f32 %v2301, 0.001
      %v2310 = vmul.f32 %v2302, 0.001
      %v2311 = vadd.f32 %v2255, %v2303
      %v2312 = vadd.f32 %v2256, %v2304
      %v2313 = vadd.f32 %v2257, %v2305
      %v2314 = vadd.f32 %v2258, %v2306
      %v2315 = vadd.f32 %v2259, %v2307
      %v2316 = vadd.f32 %v2260, %v2308
      %v2317 = vadd.f32 %v2261, %v2309
      %v2318 = vadd.f32 %v2262, %v2310
      %v2319 = vmul.f32 %v2311, %v225
      %v2320 = vmul.f32 %v2312, %v226
      %v2321 = vmul.f32 %v2313, %v227
      %v2322 = vmul.f32 %v2314, %v228
      %v2323 = vmul.f32 %v2315, %v229
      %v2324 = vmul.f32 %v2316, %v230
      %v2325 = vmul.f32 %v2317, %v231
      %v2326 = vmul.f32 %v2318, %v232
      %v2335 = vrot.slane %v2320, 7
      %v2336 = vsel %vm575, %v2335, %v2319
      %v2337 = vrot.slane %v2321, 6
      %v2338 = vsel %vm578, %v2337, %v2336
      %v2339 = vrot.slane %v2322, 5
      %v2340 = vrot.slane %v2323, 4
      %v2341 = vsel %vm560, %v2340, %v2339
      %v2342 = vrot.slane %v2324, 3
      %v2343 = vsel %vm563, %v2342, %v2341
      %v2344 = vrot.slane %v2325, 2
      %v2345 = vsel %vm566, %v2344, %v2343
      %v2346 = vrot.slane %v2326, 1
      %v2347 = vsel %vm569, %v2346, %v2345
      %vm2350 = vcmask 31749
      %v2351 = vsel %vm2350, %v2338, 0.0
      %2352 = vadd.xlane.f32.xlu0 %v2351
      %v2353 = vpop.xlane.xlu0 %2352
      %vm2354 = vcmask 28672
      %v2355 = vsel %vm2354, %v2347, 0.0
      %2356 = vadd.xlane.f32.xlu0 %v2355
      %v2357 = vpop.xlane.xlu0 %2356
      %vm2360 = vcmask 1042432
      %v2361 = vrot.slane %v2353, 5
      %v2362 = vrot.slane %v2357, 5
      %v2363 = vsel %vm2360, %v2361, %v2362
      %v2365 = vsub.f32 %v2008, %v2363
      %2367 = vset.pattern.permute.xlu0 0
      %2368 = vperm.xlu0 %2367, %v2287
      %v2369 = vpop.permute.xlu0 %2368
      %2372 = vset.pattern.permute.xlu0 0
      %2373 = vperm.xlu0 %2372, %v2288
      %v2374 = vpop.permute.xlu0 %2373
      %2377 = vset.pattern.permute.xlu0 0
      %2378 = vperm.xlu0 %2377, %v2289
      %v2379 = vpop.permute.xlu0 %2378
      %2382 = vset.pattern.permute.xlu0 0
      %2383 = vperm.xlu0 %2382, %v2290
      %v2384 = vpop.permute.xlu0 %2383
      %2387 = vset.pattern.permute.xlu0 0
      %2388 = vperm.xlu0 %2387, %v2291
      %v2389 = vpop.permute.xlu0 %2388
      %2392 = vset.pattern.permute.xlu0 0
      %2393 = vperm.xlu0 %2392, %v2292
      %v2394 = vpop.permute.xlu0 %2393
      %2397 = vset.pattern.permute.xlu0 0
      %2398 = vperm.xlu0 %2397, %v2293
      %v2399 = vpop.permute.xlu0 %2398
      %2402 = vset.pattern.permute.xlu0 0
      %2403 = vperm.xlu0 %2402, %v2294
      %v2404 = vpop.permute.xlu0 %2403
      %v2406 = vmul.f32 %v2369, %v468
      %v2407 = vmul.f32 %v2374, %v468
      %v2408 = vmul.f32 %v2379, %v468
      %v2409 = vmul.f32 %v2384, %v468
      %v2410 = vmul.f32 %v2389, %v468
      %v2411 = vmul.f32 %v2394, %v468
      %v2412 = vmul.f32 %v2399, %v468
      %v2413 = vmul.f32 %v2404, %v468
      %2414 = vset.pattern.permute.xlu0 1
      %2415 = vperm.xlu0 %2414, %v2287
      %v2416 = vpop.permute.xlu0 %2415
      %2418 = vset.pattern.permute.xlu0 1
      %2419 = vperm.xlu0 %2418, %v2288
      %v2420 = vpop.permute.xlu0 %2419
      %2422 = vset.pattern.permute.xlu0 1
      %2423 = vperm.xlu0 %2422, %v2289
      %v2424 = vpop.permute.xlu0 %2423
      %2426 = vset.pattern.permute.xlu0 1
      %2427 = vperm.xlu0 %2426, %v2290
      %v2428 = vpop.permute.xlu0 %2427
      %2430 = vset.pattern.permute.xlu0 1
      %2431 = vperm.xlu0 %2430, %v2291
      %v2432 = vpop.permute.xlu0 %2431
      %2434 = vset.pattern.permute.xlu0 1
      %2435 = vperm.xlu0 %2434, %v2292
      %v2436 = vpop.permute.xlu0 %2435
      %2438 = vset.pattern.permute.xlu0 1
      %2439 = vperm.xlu0 %2438, %v2293
      %v2440 = vpop.permute.xlu0 %2439
      %2442 = vset.pattern.permute.xlu0 1
      %2443 = vperm.xlu0 %2442, %v2294
      %v2444 = vpop.permute.xlu0 %2443
      %v2446 = vmul.f32 %v2416, %v473
      %v2447 = vmul.f32 %v2420, %v473
      %v2448 = vmul.f32 %v2424, %v473
      %v2449 = vmul.f32 %v2428, %v473
      %v2450 = vmul.f32 %v2432, %v473
      %v2451 = vmul.f32 %v2436, %v473
      %v2452 = vmul.f32 %v2440, %v473
      %v2453 = vmul.f32 %v2444, %v473
      %v2454 = vadd.f32 %v2406, %v2446
      %v2455 = vadd.f32 %v2407, %v2447
      %v2456 = vadd.f32 %v2408, %v2448
      %v2457 = vadd.f32 %v2409, %v2449
      %v2458 = vadd.f32 %v2410, %v2450
      %v2459 = vadd.f32 %v2411, %v2451
      %v2460 = vadd.f32 %v2412, %v2452
      %v2461 = vadd.f32 %v2413, %v2453
      %2462 = vset.pattern.permute.xlu0 2
      %2463 = vperm.xlu0 %2462, %v2287
      %v2464 = vpop.permute.xlu0 %2463
      %2466 = vset.pattern.permute.xlu0 2
      %2467 = vperm.xlu0 %2466, %v2288
      %v2468 = vpop.permute.xlu0 %2467
      %2470 = vset.pattern.permute.xlu0 2
      %2471 = vperm.xlu0 %2470, %v2289
      %v2472 = vpop.permute.xlu0 %2471
      %2474 = vset.pattern.permute.xlu0 2
      %2475 = vperm.xlu0 %2474, %v2290
      %v2476 = vpop.permute.xlu0 %2475
      %2478 = vset.pattern.permute.xlu0 2
      %2479 = vperm.xlu0 %2478, %v2291
      %v2480 = vpop.permute.xlu0 %2479
      %2482 = vset.pattern.permute.xlu0 2
      %2483 = vperm.xlu0 %2482, %v2292
      %v2484 = vpop.permute.xlu0 %2483
      %2486 = vset.pattern.permute.xlu0 2
      %2487 = vperm.xlu0 %2486, %v2293
      %v2488 = vpop.permute.xlu0 %2487
      %2490 = vset.pattern.permute.xlu0 2
      %2491 = vperm.xlu0 %2490, %v2294
      %v2492 = vpop.permute.xlu0 %2491
      %v2494 = vmul.f32 %v2464, %v479
      %v2495 = vmul.f32 %v2468, %v479
      %v2496 = vmul.f32 %v2472, %v479
      %v2497 = vmul.f32 %v2476, %v479
      %v2498 = vmul.f32 %v2480, %v479
      %v2499 = vmul.f32 %v2484, %v479
      %v2500 = vmul.f32 %v2488, %v479
      %v2501 = vmul.f32 %v2492, %v479
      %v2502 = vadd.f32 %v2454, %v2494
      %v2503 = vadd.f32 %v2455, %v2495
      %v2504 = vadd.f32 %v2456, %v2496
      %v2505 = vadd.f32 %v2457, %v2497
      %v2506 = vadd.f32 %v2458, %v2498
      %v2507 = vadd.f32 %v2459, %v2499
      %v2508 = vadd.f32 %v2460, %v2500
      %v2509 = vadd.f32 %v2461, %v2501
      %2510 = vset.pattern.permute.xlu0 3
      %2511 = vperm.xlu0 %2510, %v2287
      %v2512 = vpop.permute.xlu0 %2511
      %2514 = vset.pattern.permute.xlu0 3
      %2515 = vperm.xlu0 %2514, %v2288
      %v2516 = vpop.permute.xlu0 %2515
      %2518 = vset.pattern.permute.xlu0 3
      %2519 = vperm.xlu0 %2518, %v2289
      %v2520 = vpop.permute.xlu0 %2519
      %2522 = vset.pattern.permute.xlu0 3
      %2523 = vperm.xlu0 %2522, %v2290
      %v2524 = vpop.permute.xlu0 %2523
      %2526 = vset.pattern.permute.xlu0 3
      %2527 = vperm.xlu0 %2526, %v2291
      %v2528 = vpop.permute.xlu0 %2527
      %2530 = vset.pattern.permute.xlu0 3
      %2531 = vperm.xlu0 %2530, %v2292
      %v2532 = vpop.permute.xlu0 %2531
      %2534 = vset.pattern.permute.xlu0 3
      %2535 = vperm.xlu0 %2534, %v2293
      %v2536 = vpop.permute.xlu0 %2535
      %2538 = vset.pattern.permute.xlu0 3
      %2539 = vperm.xlu0 %2538, %v2294
      %v2540 = vpop.permute.xlu0 %2539
      %v2542 = vmul.f32 %v2512, %v485
      %v2543 = vmul.f32 %v2516, %v485
      %v2544 = vmul.f32 %v2520, %v485
      %v2545 = vmul.f32 %v2524, %v485
      %v2546 = vmul.f32 %v2528, %v485
      %v2547 = vmul.f32 %v2532, %v485
      %v2548 = vmul.f32 %v2536, %v485
      %v2549 = vmul.f32 %v2540, %v485
      %v2550 = vadd.f32 %v2502, %v2542
      %v2551 = vadd.f32 %v2503, %v2543
      %v2552 = vadd.f32 %v2504, %v2544
      %v2553 = vadd.f32 %v2505, %v2545
      %v2554 = vadd.f32 %v2506, %v2546
      %v2555 = vadd.f32 %v2507, %v2547
      %v2556 = vadd.f32 %v2508, %v2548
      %v2557 = vadd.f32 %v2509, %v2549
      %v2566 = vrot.slane %v2550, 2
      %v2567 = vrot.slane %v2551, 2
      %v2568 = vrot.slane %v2552, 2
      %v2569 = vrot.slane %v2553, 2
      %v2570 = vrot.slane %v2554, 2
      %v2571 = vrot.slane %v2555, 2
      %v2572 = vrot.slane %v2556, 2
      %v2573 = vrot.slane %v2557, 2
      %v2582 = vadd.f32 %v452, %v2566
      %v2583 = vadd.f32 %v453, %v2567
      %v2584 = vadd.f32 %v454, %v2568
      %v2585 = vadd.f32 %v455, %v2569
      %v2586 = vadd.f32 %v456, %v2570
      %v2587 = vadd.f32 %v457, %v2571
      %v2588 = vadd.f32 %v458, %v2572
      %v2589 = vadd.f32 %v459, %v2573
      %2591 = vset.pattern.permute.xlu0 0
      %2592 = vperm.xlu0 %2591, %v2365
      %v2593 = vpop.permute.xlu0 %2592
      %v2595 = vmul.f32 %v2593, %v500
      %v2597 = vrot.slane %v2595, 2
      %v2598 = vrot.slane %v2595, 3
      %v2599 = vrot.slane %v2595, 4
      %v2600 = vrot.slane %v2595, 5
      %v2601 = vrot.slane %v2595, 6
      %v2602 = vrot.slane %v2595, 7
      %v2603 = vrot.slane %v2595, 1
      %v2612 = vadd.f32 %v2582, %v2597
      %v2613 = vadd.f32 %v2583, %v2598
      %v2614 = vadd.f32 %v2584, %v2599
      %v2615 = vadd.f32 %v2585, %v2600
      %v2616 = vadd.f32 %v2586, %v2601
      %v2617 = vadd.f32 %v2587, %v2602
      %v2618 = vadd.f32 %v2588, %v2595
      %v2619 = vadd.f32 %v2589, %v2603
      %v2628 = vrot.slane %v2612, 6
      %v2629 = vrot.slane %v2613, 6
      %v2630 = vrot.slane %v2614, 6
      %v2631 = vrot.slane %v2615, 6
      %v2632 = vrot.slane %v2616, 6
      %v2633 = vrot.slane %v2617, 6
      %v2634 = vrot.slane %v2618, 6
      %v2635 = vrot.slane %v2619, 6
      %v2644 = vadd.f32 %v2287, %v2628
      %v2645 = vadd.f32 %v2288, %v2629
      %v2646 = vadd.f32 %v2289, %v2630
      %v2647 = vadd.f32 %v2290, %v2631
      %v2648 = vadd.f32 %v2291, %v2632
      %v2649 = vadd.f32 %v2292, %v2633
      %v2650 = vadd.f32 %v2293, %v2634
      %v2651 = vadd.f32 %v2294, %v2635
      %v2652 = vand.u32 2147483647, %v2612
      %v2653 = vand.u32 2147483647, %v2613
      %v2654 = vand.u32 2147483647, %v2614
      %v2655 = vand.u32 2147483647, %v2615
      %v2656 = vand.u32 2147483647, %v2616
      %v2657 = vand.u32 2147483647, %v2617
      %v2658 = vand.u32 2147483647, %v2618
      %v2659 = vand.u32 2147483647, %v2619
      %v2660 = vmul.f32 %v2652, 0.001
      %v2661 = vmul.f32 %v2653, 0.001
      %v2662 = vmul.f32 %v2654, 0.001
      %v2663 = vmul.f32 %v2655, 0.001
      %v2664 = vmul.f32 %v2656, 0.001
      %v2665 = vmul.f32 %v2657, 0.001
      %v2666 = vmul.f32 %v2658, 0.001
      %v2667 = vmul.f32 %v2659, 0.001
      %v2668 = vadd.f32 %v2612, %v2660
      %v2669 = vadd.f32 %v2613, %v2661
      %v2670 = vadd.f32 %v2614, %v2662
      %v2671 = vadd.f32 %v2615, %v2663
      %v2672 = vadd.f32 %v2616, %v2664
      %v2673 = vadd.f32 %v2617, %v2665
      %v2674 = vadd.f32 %v2618, %v2666
      %v2675 = vadd.f32 %v2619, %v2667
      %v2676 = vmul.f32 %v2668, %v225
      %v2677 = vmul.f32 %v2669, %v226
      %v2678 = vmul.f32 %v2670, %v227
      %v2679 = vmul.f32 %v2671, %v228
      %v2680 = vmul.f32 %v2672, %v229
      %v2681 = vmul.f32 %v2673, %v230
      %v2682 = vmul.f32 %v2674, %v231
      %v2683 = vmul.f32 %v2675, %v232
      %v2692 = vrot.slane %v2677, 7
      %v2693 = vsel %vm578, %v2692, %v2676
      %v2694 = vrot.slane %v2678, 6
      %v2695 = vrot.slane %v2679, 5
      %v2696 = vsel %vm560, %v2695, %v2694
      %v2697 = vrot.slane %v2680, 4
      %v2698 = vsel %vm563, %v2697, %v2696
      %v2699 = vrot.slane %v2681, 3
      %v2700 = vsel %vm566, %v2699, %v2698
      %v2701 = vrot.slane %v2682, 2
      %v2702 = vsel %vm569, %v2701, %v2700
      %v2703 = vrot.slane %v2683, 1
      %v2704 = vsel %vm572, %v2703, %v2702
      %vm2707 = vcmask 31750
      %v2708 = vsel %vm2707, %v2693, 0.0
      %2709 = vadd.xlane.f32.xlu0 %v2708
      %v2710 = vpop.xlane.xlu0 %2709
      %vm2711 = vcmask 29696
      %v2712 = vsel %vm2711, %v2704, 0.0
      %2713 = vadd.xlane.f32.xlu0 %v2712
      %v2714 = vpop.xlane.xlu0 %2713
      %vm2717 = vcmask 1041408
      %v2718 = vrot.slane %v2710, 6
      %v2719 = vrot.slane %v2714, 6
      %v2720 = vsel %vm2717, %v2718, %v2719
      %v2722 = vsub.f32 %v2365, %v2720
      %2724 = vset.pattern.permute.xlu0 0
      %2725 = vperm.xlu0 %2724, %v2644
      %v2726 = vpop.permute.xlu0 %2725
      %2729 = vset.pattern.permute.xlu0 0
      %2730 = vperm.xlu0 %2729, %v2645
      %v2731 = vpop.permute.xlu0 %2730
      %2734 = vset.pattern.permute.xlu0 0
      %2735 = vperm.xlu0 %2734, %v2646
      %v2736 = vpop.permute.xlu0 %2735
      %2739 = vset.pattern.permute.xlu0 0
      %2740 = vperm.xlu0 %2739, %v2647
      %v2741 = vpop.permute.xlu0 %2740
      %2744 = vset.pattern.permute.xlu0 0
      %2745 = vperm.xlu0 %2744, %v2648
      %v2746 = vpop.permute.xlu0 %2745
      %2749 = vset.pattern.permute.xlu0 0
      %2750 = vperm.xlu0 %2749, %v2649
      %v2751 = vpop.permute.xlu0 %2750
      %2754 = vset.pattern.permute.xlu0 0
      %2755 = vperm.xlu0 %2754, %v2650
      %v2756 = vpop.permute.xlu0 %2755
      %2759 = vset.pattern.permute.xlu0 0
      %2760 = vperm.xlu0 %2759, %v2651
      %v2761 = vpop.permute.xlu0 %2760
      %v2763 = vmul.f32 %v2726, %v468
      %v2764 = vmul.f32 %v2731, %v468
      %v2765 = vmul.f32 %v2736, %v468
      %v2766 = vmul.f32 %v2741, %v468
      %v2767 = vmul.f32 %v2746, %v468
      %v2768 = vmul.f32 %v2751, %v468
      %v2769 = vmul.f32 %v2756, %v468
      %v2770 = vmul.f32 %v2761, %v468
      %2771 = vset.pattern.permute.xlu0 1
      %2772 = vperm.xlu0 %2771, %v2644
      %v2773 = vpop.permute.xlu0 %2772
      %2775 = vset.pattern.permute.xlu0 1
      %2776 = vperm.xlu0 %2775, %v2645
      %v2777 = vpop.permute.xlu0 %2776
      %2779 = vset.pattern.permute.xlu0 1
      %2780 = vperm.xlu0 %2779, %v2646
      %v2781 = vpop.permute.xlu0 %2780
      %2783 = vset.pattern.permute.xlu0 1
      %2784 = vperm.xlu0 %2783, %v2647
      %v2785 = vpop.permute.xlu0 %2784
      %2787 = vset.pattern.permute.xlu0 1
      %2788 = vperm.xlu0 %2787, %v2648
      %v2789 = vpop.permute.xlu0 %2788
      %2791 = vset.pattern.permute.xlu0 1
      %2792 = vperm.xlu0 %2791, %v2649
      %v2793 = vpop.permute.xlu0 %2792
      %2795 = vset.pattern.permute.xlu0 1
      %2796 = vperm.xlu0 %2795, %v2650
      %v2797 = vpop.permute.xlu0 %2796
      %2799 = vset.pattern.permute.xlu0 1
      %2800 = vperm.xlu0 %2799, %v2651
      %v2801 = vpop.permute.xlu0 %2800
      %v2803 = vmul.f32 %v2773, %v473
      %v2804 = vmul.f32 %v2777, %v473
      %v2805 = vmul.f32 %v2781, %v473
      %v2806 = vmul.f32 %v2785, %v473
      %v2807 = vmul.f32 %v2789, %v473
      %v2808 = vmul.f32 %v2793, %v473
      %v2809 = vmul.f32 %v2797, %v473
      %v2810 = vmul.f32 %v2801, %v473
      %v2811 = vadd.f32 %v2763, %v2803
      %v2812 = vadd.f32 %v2764, %v2804
      %v2813 = vadd.f32 %v2765, %v2805
      %v2814 = vadd.f32 %v2766, %v2806
      %v2815 = vadd.f32 %v2767, %v2807
      %v2816 = vadd.f32 %v2768, %v2808
      %v2817 = vadd.f32 %v2769, %v2809
      %v2818 = vadd.f32 %v2770, %v2810
      %2819 = vset.pattern.permute.xlu0 2
      %2820 = vperm.xlu0 %2819, %v2644
      %v2821 = vpop.permute.xlu0 %2820
      %2823 = vset.pattern.permute.xlu0 2
      %2824 = vperm.xlu0 %2823, %v2645
      %v2825 = vpop.permute.xlu0 %2824
      %2827 = vset.pattern.permute.xlu0 2
      %2828 = vperm.xlu0 %2827, %v2646
      %v2829 = vpop.permute.xlu0 %2828
      %2831 = vset.pattern.permute.xlu0 2
      %2832 = vperm.xlu0 %2831, %v2647
      %v2833 = vpop.permute.xlu0 %2832
      %2835 = vset.pattern.permute.xlu0 2
      %2836 = vperm.xlu0 %2835, %v2648
      %v2837 = vpop.permute.xlu0 %2836
      %2839 = vset.pattern.permute.xlu0 2
      %2840 = vperm.xlu0 %2839, %v2649
      %v2841 = vpop.permute.xlu0 %2840
      %2843 = vset.pattern.permute.xlu0 2
      %2844 = vperm.xlu0 %2843, %v2650
      %v2845 = vpop.permute.xlu0 %2844
      %2847 = vset.pattern.permute.xlu0 2
      %2848 = vperm.xlu0 %2847, %v2651
      %v2849 = vpop.permute.xlu0 %2848
      %v2851 = vmul.f32 %v2821, %v479
      %v2852 = vmul.f32 %v2825, %v479
      %v2853 = vmul.f32 %v2829, %v479
      %v2854 = vmul.f32 %v2833, %v479
      %v2855 = vmul.f32 %v2837, %v479
      %v2856 = vmul.f32 %v2841, %v479
      %v2857 = vmul.f32 %v2845, %v479
      %v2858 = vmul.f32 %v2849, %v479
      %v2859 = vadd.f32 %v2811, %v2851
      %v2860 = vadd.f32 %v2812, %v2852
      %v2861 = vadd.f32 %v2813, %v2853
      %v2862 = vadd.f32 %v2814, %v2854
      %v2863 = vadd.f32 %v2815, %v2855
      %v2864 = vadd.f32 %v2816, %v2856
      %v2865 = vadd.f32 %v2817, %v2857
      %v2866 = vadd.f32 %v2818, %v2858
      %2867 = vset.pattern.permute.xlu0 3
      %2868 = vperm.xlu0 %2867, %v2644
      %v2869 = vpop.permute.xlu0 %2868
      %2871 = vset.pattern.permute.xlu0 3
      %2872 = vperm.xlu0 %2871, %v2645
      %v2873 = vpop.permute.xlu0 %2872
      %2875 = vset.pattern.permute.xlu0 3
      %2876 = vperm.xlu0 %2875, %v2646
      %v2877 = vpop.permute.xlu0 %2876
      %2879 = vset.pattern.permute.xlu0 3
      %2880 = vperm.xlu0 %2879, %v2647
      %v2881 = vpop.permute.xlu0 %2880
      %2883 = vset.pattern.permute.xlu0 3
      %2884 = vperm.xlu0 %2883, %v2648
      %v2885 = vpop.permute.xlu0 %2884
      %2887 = vset.pattern.permute.xlu0 3
      %2888 = vperm.xlu0 %2887, %v2649
      %v2889 = vpop.permute.xlu0 %2888
      %2891 = vset.pattern.permute.xlu0 3
      %2892 = vperm.xlu0 %2891, %v2650
      %v2893 = vpop.permute.xlu0 %2892
      %2895 = vset.pattern.permute.xlu0 3
      %2896 = vperm.xlu0 %2895, %v2651
      %v2897 = vpop.permute.xlu0 %2896
      %v2899 = vmul.f32 %v2869, %v485
      %v2900 = vmul.f32 %v2873, %v485
      %v2901 = vmul.f32 %v2877, %v485
      %v2902 = vmul.f32 %v2881, %v485
      %v2903 = vmul.f32 %v2885, %v485
      %v2904 = vmul.f32 %v2889, %v485
      %v2905 = vmul.f32 %v2893, %v485
      %v2906 = vmul.f32 %v2897, %v485
      %v2907 = vadd.f32 %v2859, %v2899
      %v2908 = vadd.f32 %v2860, %v2900
      %v2909 = vadd.f32 %v2861, %v2901
      %v2910 = vadd.f32 %v2862, %v2902
      %v2911 = vadd.f32 %v2863, %v2903
      %v2912 = vadd.f32 %v2864, %v2904
      %v2913 = vadd.f32 %v2865, %v2905
      %v2914 = vadd.f32 %v2866, %v2906
      %v2923 = vrot.slane %v2907, 1
      %v2924 = vrot.slane %v2908, 1
      %v2925 = vrot.slane %v2909, 1
      %v2926 = vrot.slane %v2910, 1
      %v2927 = vrot.slane %v2911, 1
      %v2928 = vrot.slane %v2912, 1
      %v2929 = vrot.slane %v2913, 1
      %v2930 = vrot.slane %v2914, 1
      %v2939 = vadd.f32 %v452, %v2923
      %v2940 = vadd.f32 %v453, %v2924
      %v2941 = vadd.f32 %v454, %v2925
      %v2942 = vadd.f32 %v455, %v2926
      %v2943 = vadd.f32 %v456, %v2927
      %v2944 = vadd.f32 %v457, %v2928
      %v2945 = vadd.f32 %v458, %v2929
      %v2946 = vadd.f32 %v459, %v2930
      %2948 = vset.pattern.permute.xlu0 0
      %2949 = vperm.xlu0 %2948, %v2722
      %v2950 = vpop.permute.xlu0 %2949
      %v2952 = vmul.f32 %v2950, %v500
      %v2954 = vrot.slane %v2952, 1
      %v2955 = vrot.slane %v2952, 2
      %v2956 = vrot.slane %v2952, 3
      %v2957 = vrot.slane %v2952, 4
      %v2958 = vrot.slane %v2952, 5
      %v2959 = vrot.slane %v2952, 6
      %v2960 = vrot.slane %v2952, 7
      %v2969 = vadd.f32 %v2939, %v2954
      %v2970 = vadd.f32 %v2940, %v2955
      %v2971 = vadd.f32 %v2941, %v2956
      %v2972 = vadd.f32 %v2942, %v2957
      %v2973 = vadd.f32 %v2943, %v2958
      %v2974 = vadd.f32 %v2944, %v2959
      %v2975 = vadd.f32 %v2945, %v2960
      %v2976 = vadd.f32 %v2946, %v2952
      %v2985 = vrot.slane %v2969, 7
      %v2986 = vrot.slane %v2970, 7
      %v2987 = vrot.slane %v2971, 7
      %v2988 = vrot.slane %v2972, 7
      %v2989 = vrot.slane %v2973, 7
      %v2990 = vrot.slane %v2974, 7
      %v2991 = vrot.slane %v2975, 7
      %v2992 = vrot.slane %v2976, 7
      %v3001 = vadd.f32 %v2644, %v2985
      %v3002 = vadd.f32 %v2645, %v2986
      %v3003 = vadd.f32 %v2646, %v2987
      %v3004 = vadd.f32 %v2647, %v2988
      %v3005 = vadd.f32 %v2648, %v2989
      %v3006 = vadd.f32 %v2649, %v2990
      %v3007 = vadd.f32 %v2650, %v2991
      %v3008 = vadd.f32 %v2651, %v2992
      %v3009 = vand.u32 2147483647, %v2969
      %v3010 = vand.u32 2147483647, %v2970
      %v3011 = vand.u32 2147483647, %v2971
      %v3012 = vand.u32 2147483647, %v2972
      %v3013 = vand.u32 2147483647, %v2973
      %v3014 = vand.u32 2147483647, %v2974
      %v3015 = vand.u32 2147483647, %v2975
      %v3016 = vand.u32 2147483647, %v2976
      %v3017 = vmul.f32 %v3009, 0.001
      %v3018 = vmul.f32 %v3010, 0.001
      %v3019 = vmul.f32 %v3011, 0.001
      %v3020 = vmul.f32 %v3012, 0.001
      %v3021 = vmul.f32 %v3013, 0.001
      %v3022 = vmul.f32 %v3014, 0.001
      %v3023 = vmul.f32 %v3015, 0.001
      %v3024 = vmul.f32 %v3016, 0.001
      %v3025 = vadd.f32 %v2969, %v3017
      %v3026 = vadd.f32 %v2970, %v3018
      %v3027 = vadd.f32 %v2971, %v3019
      %v3028 = vadd.f32 %v2972, %v3020
      %v3029 = vadd.f32 %v2973, %v3021
      %v3030 = vadd.f32 %v2974, %v3022
      %v3031 = vadd.f32 %v2975, %v3023
      %v3032 = vadd.f32 %v2976, %v3024
      %v3033 = vmul.f32 %v3025, %v225
      %v3034 = vmul.f32 %v3026, %v226
      %v3035 = vmul.f32 %v3027, %v227
      %v3036 = vmul.f32 %v3028, %v228
      %v3037 = vmul.f32 %v3029, %v229
      %v3038 = vmul.f32 %v3030, %v230
      %v3039 = vmul.f32 %v3031, %v231
      %v3040 = vmul.f32 %v3032, %v232
      %v3049 = vrot.slane %v3034, 7
      %v3050 = vrot.slane %v3035, 6
      %v3051 = vsel %vm560, %v3050, %v3049
      %v3052 = vrot.slane %v3036, 5
      %v3053 = vsel %vm563, %v3052, %v3051
      %v3054 = vrot.slane %v3037, 4
      %v3055 = vsel %vm566, %v3054, %v3053
      %v3056 = vrot.slane %v3038, 3
      %v3057 = vsel %vm569, %v3056, %v3055
      %v3058 = vrot.slane %v3039, 2
      %v3059 = vsel %vm572, %v3058, %v3057
      %v3060 = vrot.slane %v3040, 1
      %v3061 = vsel %vm575, %v3060, %v3059
      %vm3064 = vcmask 31751
      %v3065 = vsel %vm3064, %v3033, 0.0
      %3066 = vadd.xlane.f32.xlu0 %v3065
      %v3067 = vpop.xlane.xlu0 %3066
      %vm3068 = vcmask 30720
      %v3069 = vsel %vm3068, %v3061, 0.0
      %3070 = vadd.xlane.f32.xlu0 %v3069
      %v3071 = vpop.xlane.xlu0 %3070
      %vm3074 = vcmask 1040384
      %v3075 = vrot.slane %v3067, 7
      %v3076 = vrot.slane %v3071, 7
      %v3077 = vsel %vm3074, %v3075, %v3076
      %v3079 = vsub.f32 %v2722, %v3077
      %v3080 = vrot.slane %v225, 7
      %v3081 = vrot.slane %v226, 7
      %v3082 = vrot.slane %v227, 7
      %v3083 = vrot.slane %v228, 7
      %v3084 = vrot.slane %v229, 7
      %v3085 = vrot.slane %v230, 7
      %v3086 = vrot.slane %v231, 7
      %v3087 = vrot.slane %v232, 7
      %v3096 = vmul.f32 %v3001, %v3080
      %v3097 = vmul.f32 %v3002, %v3081
      %v3098 = vmul.f32 %v3003, %v3082
      %v3099 = vmul.f32 %v3004, %v3083
      %v3100 = vmul.f32 %v3005, %v3084
      %v3101 = vmul.f32 %v3006, %v3085
      %v3102 = vmul.f32 %v3007, %v3086
      %v3103 = vmul.f32 %v3008, %v3087
      %v3112 = vrot.slane %v3097, 7
      %v3113 = vsel %vm560, %v3112, %v3096
      %v3114 = vrot.slane %v3098, 6
      %v3115 = vsel %vm563, %v3114, %v3113
      %v3116 = vrot.slane %v3099, 5
      %v3117 = vsel %vm566, %v3116, %v3115
      %v3118 = vrot.slane %v3100, 4
      %v3119 = vsel %vm569, %v3118, %v3117
      %v3120 = vrot.slane %v3101, 3
      %v3121 = vsel %vm572, %v3120, %v3119
      %v3122 = vrot.slane %v3102, 2
      %v3123 = vsel %vm575, %v3122, %v3121
      %v3124 = vrot.slane %v3103, 1
      %v3125 = vsel %vm578, %v3124, %v3123
      %v3127 = vsel %vm581, %v3125, 0.0
      %3128 = vadd.xlane.f32.xlu0 %v3127
      %v3129 = vpop.xlane.xlu0 %3128
      %v3130 = vadd.f32 %v3129, %v3079
      %vm3131 = vcmask 7168
      %3132 = vst.msk [vmem:[%s224] sm:$0xff] %vm3131, %v3130
      %p3133 = scmp.lt.s32.totalorder %s16, 1
      %s3134 = scalar_select %p3133, %s16, 1
      %s3135 = smul.addr %s3134, 8
      %s3136 = scalar_lea.vmem %s5, %s3135
      // Predicated region
      $region41: #{tpu_custom_call.1} parent=39 // pred_check
        %p3137 = pneg %p144
      $region42: #{tpu_custom_call.1} parent=39 // pred_check_branch
        %3139 = sbr.rel (%p3137) target = $region44
      $region43: #{tpu_custom_call.1} parent=39 // pred_region
        _
      $region44: #{tpu_custom_call.1} parent=39 // pred_fallthru
        _
    $region40: #{tpu_custom_call.1} parent=5 // pred_fallthru
      _
    %p3140 = scmp.le.s32.totalorder 2, %s11
    // Predicated region
    $region45: #{tpu_custom_call.1} parent=5 // pred_check
      %p3141 = pneg %p3140
    $region46: #{tpu_custom_call.1} parent=5 // pred_check_branch
      %3143 = sbr.rel (%p3141) target = $region48
    $region47: #{tpu_custom_call.1} parent=5 // pred_region
      %s3144 = ssub.s32 %s11, 2
      // Predicated region
      $region49: #{tpu_custom_call.1} parent=47 // pred_check
        %p3145 = pneg %p150
      $region50: #{tpu_custom_call.1} parent=47 // pred_check_branch
        %3147 = sbr.rel (%p3145) target = $region52
      $region51: #{tpu_custom_call.1} parent=47 // pred_region
        %p3148 = scmp.lt.s32.totalorder %s17, 1
        %s3149 = scalar_select %p3148, %s17, 1
        %s3150 = smul.addr %s3149, 8
        %s3151 = scalar_lea.vmem %s5, %s3150
      $region52: #{tpu_custom_call.1} parent=47 // pred_fallthru
        _
    $region48: #{tpu_custom_call.1} parent=5 // pred_fallthru
      _
  $region6: #{tpu_custom_call.1} parent=0 // loop_footer
    %s15 = sadd.s32 1, %s11
  $region7: #{tpu_custom_call.1} parent=0 // loop_footer_branch
    %10 = sbr.rel target = $region3
  $region8: #{tpu_custom_call.1} parent=0 // loop_exit
    _

</llo_original>
